<compile_context>
chip_gen: v7x
topology: tpu7x:2x2x1
jax: 0.10.0
libtpu: 0.0.40
codegen_flags: <defaults>
</compile_context>

<pallas_src>
import jax
import jax.numpy as jnp
from jax.experimental import pallas as pl
from jax.experimental.pallas import tpu as pltpu


def _conv1x1_kernel(x_ref, w_ref, o_ref):
    # x_ref: (C_in, M)          activations, resident in VMEM (same block each step)
    # w_ref: (TILE_COUT, C_in)  one C_out tile of the weight (streamed, double-buffered)
    # o_ref: (M, TILE_COUT)     lane-dense output tile (last dim is C_out)
    #
    # Contract X dim 0 (C_in) with W dim 1 (C_in) -> (M, TILE_COUT): both operands
    # keep their natural, transpose-free layouts while the result is lane-dense.
    o_ref[...] = jax.lax.dot_general(
        x_ref[...],
        w_ref[...],
        dimension_numbers=(((0,), (1,)), ((), ())),
        preferred_element_type=jnp.float32,
    ).astype(o_ref.dtype)


def _round_up(v, mult):
    return ((v + mult - 1) // mult) * mult


def conv2d_1x1(x_nchw, weight_oihw, *, tile_cout=768, cast_to_bf16=False):
    """Equivalent of nn.Conv2d(C_in, C_out, kernel_size=1, stride=1, bias=False)."""
    n, cin, h, w = x_nchw.shape
    cout = weight_oihw.shape[0]
    m = n * h * w

    # (C_out, C_in, 1, 1) -> (C_out, C_in): pure reshape, no data movement.
    w2d = weight_oihw.reshape(cout, cin)

    # NCHW -> (C_in, N*H*W). For N == 1 (this module's case) it is a free reshape.
    if n == 1:
        x2d = x_nchw.reshape(cin, m)
    else:
        # TODO(synk): for N > 1, fold this activation transpose into the kernel
        # (batched (N, C_in, H*W) layout / BlockSpec) instead of a wrapper XLA op.
        x2d = jnp.transpose(x_nchw, (1, 0, 2, 3)).reshape(cin, m)

    out_dtype = x_nchw.dtype
    if cast_to_bf16:
        # Optional precision/bandwidth tradeoff (flagged, off by default): halves
        # the dominant weight HBM read; accumulation stays f32 in the kernel.
        w2d = w2d.astype(jnp.bfloat16)
        x2d = x2d.astype(jnp.bfloat16)

    # C_out tile = lane dim of the output block: must be a multiple of 128 (or the
    # full C_out).  2064 -> tile 768 -> 3 grid steps (768, 768, 528-valid partial).
    if cout <= tile_cout:
        tile = cout
    else:
        tile = min(_round_up(tile_cout, 128), cout)
    grid_n = pl.cdiv(cout, tile)

    in_itemsize = jnp.dtype(w2d.dtype).itemsize
    out_itemsize = jnp.dtype(out_dtype).itemsize
    cost = pl.CostEstimate(
        flops=2 * m * cin * cout,
        transcendentals=0,
        bytes_accessed=in_itemsize * (cout * cin + cin * m) + out_itemsize * (m * cout),
    )

    out2d = pl.pallas_call(
        _conv1x1_kernel,
        out_shape=jax.ShapeDtypeStruct((m, cout), out_dtype),
        grid=(grid_n,),
        in_specs=[
            # Activations: full-array block, identical block index every step ->
            # DMA'd HBM->VMEM once by the pipeline and kept resident.
            pl.BlockSpec((cin, m), lambda j: (0, 0)),
            # Weight: streamed one C_out tile per grid step; the pipeline
            # double-buffers so the next tile's DMA overlaps this tile's matmul.
            pl.BlockSpec((tile, cin), lambda j: (j, 0)),
        ],
        out_specs=pl.BlockSpec((m, tile), lambda j: (0, j)),
        compiler_params=pltpu.CompilerParams(
            # Independent C_out tiles: shard across v7x's two TensorCores;
            # harmless on single-TC v5e/v6e.
            dimension_semantics=("parallel",),
        ),
        cost_estimate=cost,
    )(x2d, w2d)

    # (N*H*W, C_out) -> NCHW.  Small (~400 KB) layout fix-up required only by the
    # module's NCHW output contract; far cheaper than 49-lane masked stores.
    return jnp.transpose(out2d.reshape(n, h, w, cout), (0, 3, 1, 2))


if __name__ == "__main__":
    key = jax.random.PRNGKey(0)
    k_x, k_w = jax.random.split(key)

    # Shapes implied by the module's forward: x486 is [1, 344, 7, 7],
    # conv weight is [2064, 344, 1, 1] (bias=False).
    N, C_IN, H, W = 1, 344, 7, 7
    C_OUT = 2064

    x = jax.random.normal(k_x, (N, C_IN, H, W), dtype=jnp.float32)
    # Deterministic weight init (kaiming-uniform-like scale for a 1x1 conv).
    bound = 1.0 / (C_IN ** 0.5)
    weight = jax.random.uniform(
        k_w, (C_OUT, C_IN, 1, 1), minval=-bound, maxval=bound, dtype=jnp.float32
    )

    out = conv2d_1x1(x, weight)
    out = jax.block_until_ready(out)

    # Cross-check against a plain-JAX reference of the same 1x1 conv.
    ref = jnp.einsum("nchw,oc->nohw", x, weight.reshape(C_OUT, C_IN))
    assert out.shape == (N, C_OUT, H, W), out.shape
    assert jnp.allclose(out, ref, atol=1e-4, rtol=1e-4)

    print("KERNEL_OK")
</pallas_src>

<mosaic_0001>
module attributes {stable_mosaic.version = 11 : i64} {
  func.func @_conv1x1_kernel(%arg0: i32, %arg1: memref<344x49xf32, #tpu.memory_space<vmem>>, %arg2: memref<768x344xf32, #tpu.memory_space<vmem>>, %arg3: memref<49x768xf32, #tpu.memory_space<vmem>>) attributes {dimension_semantics = [#tpu.dimension_semantics<parallel>], iteration_bounds = array<i64: 3>, scalar_prefetch = 0 : i64, scratch_operands = 0 : i64, tpu.core_type = #tpu.core_type<tc>, window_params = [{pipeline_mode = #tpu.pipeline_mode<synchronous>, transform_indices = @transform_0, window_bounds = array<i64: 344, 49>}, {transform_indices = @transform_1, window_bounds = array<i64: 768, 344>}, {transform_indices = @transform_2, window_bounds = array<i64: 49, 768>}]} {
    %c0 = arith.constant 0 : index
    %c0_0 = arith.constant 0 : index
    %0 = vector.load %arg1[%c0, %c0_0] : memref<344x49xf32, #tpu.memory_space<vmem>>, vector<344x49xf32>
    %c0_1 = arith.constant 0 : index
    %c0_2 = arith.constant 0 : index
    %1 = vector.load %arg2[%c0_1, %c0_2] : memref<768x344xf32, #tpu.memory_space<vmem>>, vector<768x344xf32>
    %cst = arith.constant dense<0.000000e+00> : vector<49x768xf32>
    %2 = tpu.matmul %0, %1, %cst {dimension_numbers = #tpu.dot_dimension_numbers<[0], [1], [1], [0], [0, 1, 1, 0], [], []>} : vector<344x49xf32>, vector<768x344xf32>, vector<49x768xf32> -> vector<49x768xf32>
    %c0_3 = arith.constant 0 : index
    %c0_4 = arith.constant 0 : index
    %3 = vector.load %arg3[%c0_3, %c0_4] : memref<49x768xf32, #tpu.memory_space<vmem>>, vector<49x768xf32>
    tpu.vector_store %arg3[%c0_3, %c0_4], %2 {strides = array<i32>} : memref<49x768xf32, #tpu.memory_space<vmem>>, vector<49x768xf32>,
    return
  }
  func.func @transform_0(%arg0: i32) -> (i32, i32) {
    %c0_i32 = arith.constant 0 : i32
    %c0_i32_0 = arith.constant 0 : i32
    %c0_i32_1 = arith.constant 0 : i32
    return %c0_i32, %c0_i32_0 : i32, i32
  }
  func.func @transform_1(%arg0: i32) -> (i32, i32) {
    %c0_i32 = arith.constant 0 : i32
    %c0_i32_0 = arith.constant 0 : i32
    return %arg0, %c0_i32 : i32, i32
  }
  func.func @transform_2(%arg0: i32) -> (i32, i32) {
    %c0_i32 = arith.constant 0 : i32
    %c0_i32_0 = arith.constant 0 : i32
    return %c0_i32, %arg0 : i32, i32
  }
}

</mosaic_0001>

<llo_original>
// kernel: tpu_custom_call.1
$region0: #{tpu_custom_call.1}
  #allocation0 [shape = 'u32[]', space=smem, size = 0x4, offset = 0x4, fixed_abs, tag = 'smem constant byte address 0x4 - core index']
  #allocation1 [shape = 'u32[144,128]{1,0:T(1,128)}', space=vmem, size = 0x12000, scoped, tag = 'internal scratch']
  %s0 = inlined_call_operand.vmem [shape: f32[344,49], index: 0, kind: input, shape index: {}]
  %s1 = inlined_call_operand.vmem [shape: f32[2064,344], index: 1, kind: input, shape index: {}]
  %s2 = inlined_call_operand.hbm [shape: f32[49,2064], index: 2, kind: output, shape index: {}]
  %s3 = sld [smem:[#allocation0]]
  $region41: #{tpu_custom_call.1} parent=0
    _
  %s5 = ssub.s32 1, %s3
  %s6 = scalar_select 0, %s5, %s3
  $region1: #{tpu_custom_call.1} parent=0
    #allocation2 [shape = 'u8[344064]{0}', space=vmem, size = 0x54000, scoped, tag = 'output window, operand 0']
    #allocation3 [shape = 's32[2]{0}', space=sflag, size = 0x8, scoped, tag = 'scoped memory for tpu_custom_call.1']
    %7 = vsyncpa [#allocation3], 0
    %s8 = scalar_lea.sflag [#allocation3], 1
    %9 = vsyncpa %s8, 0
    loop: start=0, step=1, limit=5
    $region2: #{tpu_custom_call.1} parent=1 // loop_pre_header
      _
    $region3: #{tpu_custom_call.1} parent=1 // loop_header
      %s11 = sphi 0, %s15
      %p12 = scmp.ge.s32.totalorder %s11, 5
      %s19 = sphi 0, %s19
      %s21 = sphi 0, %s19
      %s22 = sphi 0, %s21
      %s36 = sphi 0, %s22
      %s42 = sphi 0, %s44
      %s45 = sphi 0, %s42
      %s46 = sphi 0, %s45
      %s62 = sphi 0, %s46
      %s68 = sphi 0, %s70
      %s71 = sphi 0, %s68
      %s72 = sphi 0, %s71
      %s88 = sphi 0, %s72
    $region4: #{tpu_custom_call.1} parent=1 // loop_header_branch
      %14 = sbr.rel (%p12) target = $region8
    $region5: #{tpu_custom_call.1} parent=1 // loop_body
      %s16 = ssub.s32 %s11, 1
      %s17 = ssub.s32 %s11, 2
      %s18 = sadd.s32 %s11, 1
      %s20 = sadd.s32 %s19, 1
      %p23 = scmp.eq.s32.totalorder %s11, 2
      %p24 = scmp.ne.s32.totalorder %s19, %s21
      %p25 = scmp.eq.s32.totalorder %s11, 0
      %p26 = por %p24, %p25
      %p27 = scmp.ne.s32.totalorder %s19, %s21
      %p28 = scmp.eq.s32.totalorder %s16, 2
      %p29 = por %p27, %p28
      %p30 = scmp.ne.s32.totalorder %s21, %s22
      %p31 = scmp.eq.s32.totalorder %s16, 0
      %p32 = por %p30, %p31
      %p33 = scmp.ne.s32.totalorder %s21, %s22
      %p34 = scmp.eq.s32.totalorder %s17, 2
      %p35 = por %p33, %p34
      %p37 = scmp.ne.s32.totalorder %s22, %s36
      %p38 = scmp.eq.s32.totalorder %s17, 0
      %p39 = por %p37, %p38
      %s40 = ssub.s32 %s11, %s18
      %p41 = scmp.eq.s32.totalorder %s40, 0
      %s43 = sadd.s32 %s42, 1
      %s44 = scalar_select %p41, %s42, %s43
      %p47 = pneg %p41
      %p48 = scmp.eq.s32.totalorder %s11, 2
      %p49 = por %p47, %p48
      %p50 = scmp.ne.s32.totalorder %s42, %s45
      %p51 = scmp.eq.s32.totalorder %s11, 0
      %p52 = por %p50, %p51
      %p53 = scmp.ne.s32.totalorder %s42, %s45
      %p54 = scmp.eq.s32.totalorder %s16, 2
      %p55 = por %p53, %p54
      %p56 = scmp.ne.s32.totalorder %s45, %s46
      %p57 = scmp.eq.s32.totalorder %s16, 0
      %p58 = por %p56, %p57
      %p59 = scmp.ne.s32.totalorder %s45, %s46
      %p60 = scmp.eq.s32.totalorder %s17, 2
      %p61 = por %p59, %p60
      %p63 = scmp.ne.s32.totalorder %s46, %s62
      %p64 = scmp.eq.s32.totalorder %s17, 0
      %p65 = por %p63, %p64
      %s66 = ssub.s32 %s11, %s18
      %p67 = scmp.eq.s32.totalorder %s66, 0
      %s69 = sadd.s32 %s68, 1
      %s70 = scalar_select %p67, %s68, %s69
      %p73 = pneg %p67
      %p74 = scmp.eq.s32.totalorder %s11, 2
      %p75 = por %p73, %p74
      %p76 = scmp.ne.s32.totalorder %s68, %s71
      %p77 = scmp.eq.s32.totalorder %s11, 0
      %p78 = por %p76, %p77
      %p79 = scmp.ne.s32.totalorder %s68, %s71
      %p80 = scmp.eq.s32.totalorder %s16, 2
      %p81 = por %p79, %p80
      %p82 = scmp.ne.s32.totalorder %s71, %s72
      %p83 = scmp.eq.s32.totalorder %s16, 0
      %p84 = por %p82, %p83
      %p85 = scmp.ne.s32.totalorder %s71, %s72
      %p86 = scmp.eq.s32.totalorder %s17, 2
      %p87 = por %p85, %p86
      %p89 = scmp.ne.s32.totalorder %s72, %s88
      %p90 = scmp.eq.s32.totalorder %s17, 0
      %p91 = por %p89, %p90
      %p92 = scmp.le.s32.totalorder 1, %s11
      %p93 = scmp.lt.s32.totalorder %s11, 4
      %p94 = pnand %p92, %p93
      %p95 = pneg %p94
      // Predicated region
      $region9: #{tpu_custom_call.1} parent=5 // pred_check
        _
      $region10: #{tpu_custom_call.1} parent=5 // pred_check_branch
        %97 = sbr.rel (%p94) target = $region12
      $region11: #{tpu_custom_call.1} parent=5 // pred_region
        %s98 = ssub.s32 %s11, 1
        // Predicated region
        $region13: #{tpu_custom_call.1} parent=11 // pred_check
          %p99 = pneg %p32
        $region14: #{tpu_custom_call.1} parent=11 // pred_check_branch
          %101 = sbr.rel (%p99) target = $region16
        $region15: #{tpu_custom_call.1} parent=11 // pred_region
          _
        $region16: #{tpu_custom_call.1} parent=11 // pred_fallthru
          _
      $region12: #{tpu_custom_call.1} parent=5 // pred_fallthru
        _
      %p102 = scmp.lt.s32.totalorder %s11, 3
      // Predicated region
      $region17: #{tpu_custom_call.1} parent=5 // pred_check
        %p103 = pneg %p102
      $region18: #{tpu_custom_call.1} parent=5 // pred_check_branch
        %105 = sbr.rel (%p103) target = $region20
      $region19: #{tpu_custom_call.1} parent=5 // pred_region
        // Predicated region
        $region21: #{tpu_custom_call.1} parent=19 // pred_check
          %p106 = pneg %p52
        $region22: #{tpu_custom_call.1} parent=19 // pred_check_branch
          %108 = sbr.rel (%p106) target = $region24
        $region23: #{tpu_custom_call.1} parent=19 // pred_region
          %s109 = smul.u32 96, %s11
          %s110 = ssub.s32 258, %s109
          %p111 = scmp.lt.s32.totalorder %s110, 96
          %s112 = scalar_select %p111, %s110, 96
          %s113 = smul.u32 128, %s112
          %s114 = smul.u32 %s113, 3
          %p115 = scmp.lt.s32.totalorder %s109, 257
          %s116 = scalar_select %p115, %s109, 257
          %s117 = smul.addr %s116, 3
          %s118 = smul.addr %s117, 8
          %s119 = scalar_lea.vmem %s1, %s118
          %s120 = smul.u32 96, %s11
          %s121 = ssub.s32 258, %s120
          %p122 = scmp.lt.s32.totalorder %s121, 96
          %s123 = scalar_select %p122, %s121, 96
          %s124 = smul.u32 128, %s123
          %s125 = smul.u32 %s124, 3
        $region24: #{tpu_custom_call.1} parent=19 // pred_fallthru
          _
      $region20: #{tpu_custom_call.1} parent=5 // pred_fallthru
        _
      %p126 = scmp.le.s32.totalorder 1, %s11
      %p127 = scmp.lt.s32.totalorder %s11, 4
      %p128 = pnand %p126, %p127
      %p129 = pneg %p128
      // Predicated region
      $region25: #{tpu_custom_call.1} parent=5 // pred_check
        _
      $region26: #{tpu_custom_call.1} parent=5 // pred_check_branch
        %131 = sbr.rel (%p128) target = $region28
      $region27: #{tpu_custom_call.1} parent=5 // pred_region
        %s132 = ssub.s32 %s11, 1
        %p133 = pneg %p32
        %p134 = pneg %p29
        %s135 = smul.u32 96, %s16
        %s136 = ssub.s32 258, %s135
        %p137 = scmp.lt.s32.totalorder %s136, 96
        %s138 = scalar_select %p137, %s136, 96
        %s139 = smul.u32 128, %s138
        %s140 = smul.u32 %s139, 3
        %p141 = scmp.lt.s32.totalorder %s135, 257
        %s142 = scalar_select %p141, %s135, 257
        %s143 = smul.addr %s142, 3
        %s144 = smul.addr %s143, 8
        %s145 = scalar_lea.vmem %s1, %s144
        %p146 = pneg %p58
        %p147 = pneg %p55
        %p148 = pneg %p84
        %p149 = pneg %p81
        %s150 = sand.u32 %s71, 1
        %s151 = scalar_lea.sflag [#allocation3], %s150
        %s152 = sand.u32 %s71, 1
        %s153 = smul.addr %s152, 336
        %s154 = scalar_lea.vmem [#allocation2], %s153
        %s155 = smul.u32 96, %s16
        %s156 = ssub.s32 258, %s155
        %p157 = scmp.lt.s32.totalorder %s156, 96
        %s158 = scalar_select %p157, %s156, 96
        %s159 = smul.u32 128, %s158
        %s160 = smul.u32 %s159, 3
        %p161 = scmp.lt.s32.totalorder %s155, 257
        %s162 = scalar_select %p161, %s155, 257
        %s163 = smul.addr %s162, 3
        %s164 = smul.addr %s163, 8
        %s165 = scalar_lea.vmem %s1, %s164
        %s166 = smul.u32 96, %s16
        %s167 = ssub.s32 258, %s166
        %p168 = scmp.lt.s32.totalorder %s167, 96
        %s169 = scalar_select %p168, %s167, 96
        %s170 = smul.u32 128, %s169
        %s171 = smul.u32 %s170, 3
        %s172 = smul.u32 6, %s16
        %s173 = ssub.s32 17, %s172
        %p174 = scmp.lt.s32.totalorder %s173, 6
        %s175 = scalar_select %p174, %s173, 6
        %s176 = smul.u32 896, %s175
        %v177 = vld [vmem:[%s0] sm:$0xff]
        %v178 = vld [vmem:[%s0 + $0x8] sm:$0xff]
        %v179 = vld [vmem:[%s0 + $0x10] sm:$0xff]
        %v180 = vld [vmem:[%s0 + $0x18] sm:$0xff]
        %v181 = vld [vmem:[%s0 + $0x20] sm:$0xff]
        %v182 = vld [vmem:[%s0 + $0x28] sm:$0xff]
        %v183 = vld [vmem:[%s0 + $0x30] sm:$0xff]
        %v184 = vld [vmem:[%s0 + $0x38] sm:$0xff]
        %v185 = vld [vmem:[%s0 + $0x40] sm:$0xff]
        %v186 = vld [vmem:[%s0 + $0x48] sm:$0xff]
        %v187 = vld [vmem:[%s0 + $0x50] sm:$0xff]
        %v188 = vld [vmem:[%s0 + $0x58] sm:$0xff]
        %v189 = vld [vmem:[%s0 + $0x60] sm:$0xff]
        %v190 = vld [vmem:[%s0 + $0x68] sm:$0xff]
        %v191 = vld [vmem:[%s0 + $0x70] sm:$0xff]
        %v192 = vld [vmem:[%s0 + $0x78] sm:$0xff]
        %v193 = vld [vmem:[%s0 + $0x80] sm:$0xff]
        %v194 = vld [vmem:[%s0 + $0x88] sm:$0xff]
        %v195 = vld [vmem:[%s0 + $0x90] sm:$0xff]
        %v196 = vld [vmem:[%s0 + $0x98] sm:$0xff]
        %v197 = vld [vmem:[%s0 + $0xa0] sm:$0xff]
        %v198 = vld [vmem:[%s0 + $0xa8] sm:$0xff]
        %v199 = vld [vmem:[%s0 + $0xb0] sm:$0xff]
        %v200 = vld [vmem:[%s0 + $0xb8] sm:$0xff]
        %v201 = vld [vmem:[%s0 + $0xc0] sm:$0xff]
        %v202 = vld [vmem:[%s0 + $0xc8] sm:$0xff]
        %v203 = vld [vmem:[%s0 + $0xd0] sm:$0xff]
        %v204 = vld [vmem:[%s0 + $0xd8] sm:$0xff]
        %v205 = vld [vmem:[%s0 + $0xe0] sm:$0xff]
        %v206 = vld [vmem:[%s0 + $0xe8] sm:$0xff]
        %v207 = vld [vmem:[%s0 + $0xf0] sm:$0xff]
        %v208 = vld [vmem:[%s0 + $0xf8] sm:$0xff]
        %v209 = vld [vmem:[%s0 + $0x100] sm:$0xff]
        %v210 = vld [vmem:[%s0 + $0x108] sm:$0xff]
        %v211 = vld [vmem:[%s0 + $0x110] sm:$0xff]
        %v212 = vld [vmem:[%s0 + $0x118] sm:$0xff]
        %v213 = vld [vmem:[%s0 + $0x120] sm:$0xff]
        %v214 = vld [vmem:[%s0 + $0x128] sm:$0xff]
        %v215 = vld [vmem:[%s0 + $0x130] sm:$0xff]
        %v216 = vld [vmem:[%s0 + $0x138] sm:$0xff]
        %v217 = vld [vmem:[%s0 + $0x140] sm:$0xff]
        %v218 = vld [vmem:[%s0 + $0x148] sm:$0xff]
        %v219 = vld [vmem:[%s0 + $0x150] sm:$0xff]
        %v220 = vld [vmem:[%s165] sm:$0xff]
        %v221 = vld [vmem:[%s165 + $0x8] sm:$0xff]
        %v222 = vld [vmem:[%s165 + $0x10] sm:$0xff]
        %v223 = vld [vmem:[%s165 + $0x18] sm:$0xff]
        %v224 = vld [vmem:[%s165 + $0x20] sm:$0xff]
        %v225 = vld [vmem:[%s165 + $0x28] sm:$0xff]
        %v226 = vld [vmem:[%s165 + $0x30] sm:$0xff]
        %v227 = vld [vmem:[%s165 + $0x38] sm:$0xff]
        %v228 = vld [vmem:[%s165 + $0x40] sm:$0xff]
        %v229 = vld [vmem:[%s165 + $0x48] sm:$0xff]
        %v230 = vld [vmem:[%s165 + $0x50] sm:$0xff]
        %v231 = vld [vmem:[%s165 + $0x58] sm:$0xff]
        %v232 = vld [vmem:[%s165 + $0x60] sm:$0xff]
        %v233 = vld [vmem:[%s165 + $0x68] sm:$0xff]
        %v234 = vld [vmem:[%s165 + $0x70] sm:$0xff]
        %v235 = vld [vmem:[%s165 + $0x78] sm:$0xff]
        %v236 = vld [vmem:[%s165 + $0x80] sm:$0xff]
        %v237 = vld [vmem:[%s165 + $0x88] sm:$0xff]
        %v238 = vld [vmem:[%s165 + $0x90] sm:$0xff]
        %v239 = vld [vmem:[%s165 + $0x98] sm:$0xff]
        %v240 = vld [vmem:[%s165 + $0xa0] sm:$0xff]
        %v241 = vld [vmem:[%s165 + $0xa8] sm:$0xff]
        %v242 = vld [vmem:[%s165 + $0xb0] sm:$0xff]
        %v243 = vld [vmem:[%s165 + $0xb8] sm:$0xff]
        %v244 = vld [vmem:[%s165 + $0xc0] sm:$0xff]
        %v245 = vld [vmem:[%s165 + $0xc8] sm:$0xff]
        %v246 = vld [vmem:[%s165 + $0xd0] sm:$0xff]
        %v247 = vld [vmem:[%s165 + $0xd8] sm:$0xff]
        %v248 = vld [vmem:[%s165 + $0xe0] sm:$0xff]
        %v249 = vld [vmem:[%s165 + $0xe8] sm:$0xff]
        %v250 = vld [vmem:[%s165 + $0xf0] sm:$0xff]
        %v251 = vld [vmem:[%s165 + $0xf8] sm:$0xff]
        %v252 = vld [vmem:[%s165 + $0x100] sm:$0xff]
        %v253 = vld [vmem:[%s165 + $0x108] sm:$0xff]
        %v254 = vld [vmem:[%s165 + $0x110] sm:$0xff]
        %v255 = vld [vmem:[%s165 + $0x118] sm:$0xff]
        %v256 = vld [vmem:[%s165 + $0x120] sm:$0xff]
        %v257 = vld [vmem:[%s165 + $0x128] sm:$0xff]
        %v258 = vld [vmem:[%s165 + $0x130] sm:$0xff]
        %v259 = vld [vmem:[%s165 + $0x138] sm:$0xff]
        %v260 = vld [vmem:[%s165 + $0x140] sm:$0xff]
        %v261 = vld [vmem:[%s165 + $0x148] sm:$0xff]
        %v262 = vld [vmem:[%s165 + $0x150] sm:$0xff]
        %v263 = vld [vmem:[%s165 + $0x158] sm:$0xff]
        %v264 = vld [vmem:[%s165 + $0x160] sm:$0xff]
        %v265 = vld [vmem:[%s165 + $0x168] sm:$0xff]
        %v266 = vld [vmem:[%s165 + $0x170] sm:$0xff]
        %v267 = vld [vmem:[%s165 + $0x178] sm:$0xff]
        %v268 = vld [vmem:[%s165 + $0x180] sm:$0xff]
        %v269 = vld [vmem:[%s165 + $0x188] sm:$0xff]
        %v270 = vld [vmem:[%s165 + $0x190] sm:$0xff]
        %v271 = vld [vmem:[%s165 + $0x198] sm:$0xff]
        %v272 = vld [vmem:[%s165 + $0x1a0] sm:$0xff]
        %v273 = vld [vmem:[%s165 + $0x1a8] sm:$0xff]
        %v274 = vld [vmem:[%s165 + $0x1b0] sm:$0xff]
        %v275 = vld [vmem:[%s165 + $0x1b8] sm:$0xff]
        %v276 = vld [vmem:[%s165 + $0x1c0] sm:$0xff]
        %v277 = vld [vmem:[%s165 + $0x1c8] sm:$0xff]
        %v278 = vld [vmem:[%s165 + $0x1d0] sm:$0xff]
        %v279 = vld [vmem:[%s165 + $0x1d8] sm:$0xff]
        %v280 = vld [vmem:[%s165 + $0x1e0] sm:$0xff]
        %v281 = vld [vmem:[%s165 + $0x1e8] sm:$0xff]
        %v282 = vld [vmem:[%s165 + $0x1f0] sm:$0xff]
        %v283 = vld [vmem:[%s165 + $0x1f8] sm:$0xff]
        %v284 = vld [vmem:[%s165 + $0x200] sm:$0xff]
        %v285 = vld [vmem:[%s165 + $0x208] sm:$0xff]
        %v286 = vld [vmem:[%s165 + $0x210] sm:$0xff]
        %v287 = vld [vmem:[%s165 + $0x218] sm:$0xff]
        %v288 = vld [vmem:[%s165 + $0x220] sm:$0xff]
        %v289 = vld [vmem:[%s165 + $0x228] sm:$0xff]
        %v290 = vld [vmem:[%s165 + $0x230] sm:$0xff]
        %v291 = vld [vmem:[%s165 + $0x238] sm:$0xff]
        %v292 = vld [vmem:[%s165 + $0x240] sm:$0xff]
        %v293 = vld [vmem:[%s165 + $0x248] sm:$0xff]
        %v294 = vld [vmem:[%s165 + $0x250] sm:$0xff]
        %v295 = vld [vmem:[%s165 + $0x258] sm:$0xff]
        %v296 = vld [vmem:[%s165 + $0x260] sm:$0xff]
        %v297 = vld [vmem:[%s165 + $0x268] sm:$0xff]
        %v298 = vld [vmem:[%s165 + $0x270] sm:$0xff]
        %v299 = vld [vmem:[%s165 + $0x278] sm:$0xff]
        %v300 = vld [vmem:[%s165 + $0x280] sm:$0xff]
        %v301 = vld [vmem:[%s165 + $0x288] sm:$0xff]
        %v302 = vld [vmem:[%s165 + $0x290] sm:$0xff]
        %v303 = vld [vmem:[%s165 + $0x298] sm:$0xff]
        %v304 = vld [vmem:[%s165 + $0x2a0] sm:$0xff]
        %v305 = vld [vmem:[%s165 + $0x2a8] sm:$0xff]
        %v306 = vld [vmem:[%s165 + $0x2b0] sm:$0xff]
        %v307 = vld [vmem:[%s165 + $0x2b8] sm:$0xff]
        %v308 = vld [vmem:[%s165 + $0x2c0] sm:$0xff]
        %v309 = vld [vmem:[%s165 + $0x2c8] sm:$0xff]
        %v310 = vld [vmem:[%s165 + $0x2d0] sm:$0xff]
        %v311 = vld [vmem:[%s165 + $0x2d8] sm:$0xff]
        %v312 = vld [vmem:[%s165 + $0x2e0] sm:$0xff]
        %v313 = vld [vmem:[%s165 + $0x2e8] sm:$0xff]
        %v314 = vld [vmem:[%s165 + $0x2f0] sm:$0xff]
        %v315 = vld [vmem:[%s165 + $0x2f8] sm:$0xff]
        %v316 = vld [vmem:[%s165 + $0x300] sm:$0xff]
        %v317 = vld [vmem:[%s165 + $0x308] sm:$0xff]
        %v318 = vld [vmem:[%s165 + $0x310] sm:$0xff]
        %v319 = vld [vmem:[%s165 + $0x318] sm:$0xff]
        %v320 = vld [vmem:[%s165 + $0x320] sm:$0xff]
        %v321 = vld [vmem:[%s165 + $0x328] sm:$0xff]
        %v322 = vld [vmem:[%s165 + $0x330] sm:$0xff]
        %v323 = vld [vmem:[%s165 + $0x338] sm:$0xff]
        %v324 = vld [vmem:[%s165 + $0x340] sm:$0xff]
        %v325 = vld [vmem:[%s165 + $0x348] sm:$0xff]
        %v326 = vld [vmem:[%s165 + $0x350] sm:$0xff]
        %v327 = vld [vmem:[%s165 + $0x358] sm:$0xff]
        %v328 = vld [vmem:[%s165 + $0x360] sm:$0xff]
        %v329 = vld [vmem:[%s165 + $0x368] sm:$0xff]
        %v330 = vld [vmem:[%s165 + $0x370] sm:$0xff]
        %v331 = vld [vmem:[%s165 + $0x378] sm:$0xff]
        %v332 = vld [vmem:[%s165 + $0x380] sm:$0xff]
        %v333 = vld [vmem:[%s165 + $0x388] sm:$0xff]
        %v334 = vld [vmem:[%s165 + $0x390] sm:$0xff]
        %v335 = vld [vmem:[%s165 + $0x398] sm:$0xff]
        %v336 = vld [vmem:[%s165 + $0x3a0] sm:$0xff]
        %v337 = vld [vmem:[%s165 + $0x3a8] sm:$0xff]
        %v338 = vld [vmem:[%s165 + $0x3b0] sm:$0xff]
        %v339 = vld [vmem:[%s165 + $0x3b8] sm:$0xff]
        %v340 = vld [vmem:[%s165 + $0x3c0] sm:$0xff]
        %v341 = vld [vmem:[%s165 + $0x3c8] sm:$0xff]
        %v342 = vld [vmem:[%s165 + $0x3d0] sm:$0xff]
        %v343 = vld [vmem:[%s165 + $0x3d8] sm:$0xff]
        %v344 = vld [vmem:[%s165 + $0x3e0] sm:$0xff]
        %v345 = vld [vmem:[%s165 + $0x3e8] sm:$0xff]
        %v346 = vld [vmem:[%s165 + $0x3f0] sm:$0xff]
        %v347 = vld [vmem:[%s165 + $0x3f8] sm:$0xff]
        %v348 = vld [vmem:[%s165 + $0x400] sm:$0xff]
        %v349 = vld [vmem:[%s165 + $0x408] sm:$0xff]
        %v350 = vld [vmem:[%s165 + $0x410] sm:$0xff]
        %v351 = vld [vmem:[%s165 + $0x418] sm:$0xff]
        %v352 = vld [vmem:[%s165 + $0x420] sm:$0xff]
        %v353 = vld [vmem:[%s165 + $0x428] sm:$0xff]
        %v354 = vld [vmem:[%s165 + $0x430] sm:$0xff]
        %v355 = vld [vmem:[%s165 + $0x438] sm:$0xff]
        %v356 = vld [vmem:[%s165 + $0x440] sm:$0xff]
        %v357 = vld [vmem:[%s165 + $0x448] sm:$0xff]
        %v358 = vld [vmem:[%s165 + $0x450] sm:$0xff]
        %v359 = vld [vmem:[%s165 + $0x458] sm:$0xff]
        %v360 = vld [vmem:[%s165 + $0x460] sm:$0xff]
        %v361 = vld [vmem:[%s165 + $0x468] sm:$0xff]
        %v362 = vld [vmem:[%s165 + $0x470] sm:$0xff]
        %v363 = vld [vmem:[%s165 + $0x478] sm:$0xff]
        %v364 = vld [vmem:[%s165 + $0x480] sm:$0xff]
        %v365 = vld [vmem:[%s165 + $0x488] sm:$0xff]
        %v366 = vld [vmem:[%s165 + $0x490] sm:$0xff]
        %v367 = vld [vmem:[%s165 + $0x498] sm:$0xff]
        %v368 = vld [vmem:[%s165 + $0x4a0] sm:$0xff]
        %v369 = vld [vmem:[%s165 + $0x4a8] sm:$0xff]
        %v370 = vld [vmem:[%s165 + $0x4b0] sm:$0xff]
        %v371 = vld [vmem:[%s165 + $0x4b8] sm:$0xff]
        %v372 = vld [vmem:[%s165 + $0x4c0] sm:$0xff]
        %v373 = vld [vmem:[%s165 + $0x4c8] sm:$0xff]
        %v374 = vld [vmem:[%s165 + $0x4d0] sm:$0xff]
        %v375 = vld [vmem:[%s165 + $0x4d8] sm:$0xff]
        %v376 = vld [vmem:[%s165 + $0x4e0] sm:$0xff]
        %v377 = vld [vmem:[%s165 + $0x4e8] sm:$0xff]
        %v378 = vld [vmem:[%s165 + $0x4f0] sm:$0xff]
        %v379 = vld [vmem:[%s165 + $0x4f8] sm:$0xff]
        %v380 = vld [vmem:[%s165 + $0x500] sm:$0xff]
        %v381 = vld [vmem:[%s165 + $0x508] sm:$0xff]
        %v382 = vld [vmem:[%s165 + $0x510] sm:$0xff]
        %v383 = vld [vmem:[%s165 + $0x518] sm:$0xff]
        %v384 = vld [vmem:[%s165 + $0x520] sm:$0xff]
        %v385 = vld [vmem:[%s165 + $0x528] sm:$0xff]
        %v386 = vld [vmem:[%s165 + $0x530] sm:$0xff]
        %v387 = vld [vmem:[%s165 + $0x538] sm:$0xff]
        %v388 = vld [vmem:[%s165 + $0x540] sm:$0xff]
        %v389 = vld [vmem:[%s165 + $0x548] sm:$0xff]
        %v390 = vld [vmem:[%s165 + $0x550] sm:$0xff]
        %v391 = vld [vmem:[%s165 + $0x558] sm:$0xff]
        %v392 = vld [vmem:[%s165 + $0x560] sm:$0xff]
        %v393 = vld [vmem:[%s165 + $0x568] sm:$0xff]
        %v394 = vld [vmem:[%s165 + $0x570] sm:$0xff]
        %v395 = vld [vmem:[%s165 + $0x578] sm:$0xff]
        %v396 = vld [vmem:[%s165 + $0x580] sm:$0xff]
        %v397 = vld [vmem:[%s165 + $0x588] sm:$0xff]
        %v398 = vld [vmem:[%s165 + $0x590] sm:$0xff]
        %v399 = vld [vmem:[%s165 + $0x598] sm:$0xff]
        %v400 = vld [vmem:[%s165 + $0x5a0] sm:$0xff]
        %v401 = vld [vmem:[%s165 + $0x5a8] sm:$0xff]
        %v402 = vld [vmem:[%s165 + $0x5b0] sm:$0xff]
        %v403 = vld [vmem:[%s165 + $0x5b8] sm:$0xff]
        %v404 = vld [vmem:[%s165 + $0x5c0] sm:$0xff]
        %v405 = vld [vmem:[%s165 + $0x5c8] sm:$0xff]
        %v406 = vld [vmem:[%s165 + $0x5d0] sm:$0xff]
        %v407 = vld [vmem:[%s165 + $0x5d8] sm:$0xff]
        %v408 = vld [vmem:[%s165 + $0x5e0] sm:$0xff]
        %v409 = vld [vmem:[%s165 + $0x5e8] sm:$0xff]
        %v410 = vld [vmem:[%s165 + $0x5f0] sm:$0xff]
        %v411 = vld [vmem:[%s165 + $0x5f8] sm:$0xff]
        %v412 = vld [vmem:[%s165 + $0x600] sm:$0xff]
        %v413 = vld [vmem:[%s165 + $0x608] sm:$0xff]
        %v414 = vld [vmem:[%s165 + $0x610] sm:$0xff]
        %v415 = vld [vmem:[%s165 + $0x618] sm:$0xff]
        %v416 = vld [vmem:[%s165 + $0x620] sm:$0xff]
        %v417 = vld [vmem:[%s165 + $0x628] sm:$0xff]
        %v418 = vld [vmem:[%s165 + $0x630] sm:$0xff]
        %v419 = vld [vmem:[%s165 + $0x638] sm:$0xff]
        %v420 = vld [vmem:[%s165 + $0x640] sm:$0xff]
        %v421 = vld [vmem:[%s165 + $0x648] sm:$0xff]
        %v422 = vld [vmem:[%s165 + $0x650] sm:$0xff]
        %v423 = vld [vmem:[%s165 + $0x658] sm:$0xff]
        %v424 = vld [vmem:[%s165 + $0x660] sm:$0xff]
        %v425 = vld [vmem:[%s165 + $0x668] sm:$0xff]
        %v426 = vld [vmem:[%s165 + $0x670] sm:$0xff]
        %v427 = vld [vmem:[%s165 + $0x678] sm:$0xff]
        %v428 = vld [vmem:[%s165 + $0x680] sm:$0xff]
        %v429 = vld [vmem:[%s165 + $0x688] sm:$0xff]
        %v430 = vld [vmem:[%s165 + $0x690] sm:$0xff]
        %v431 = vld [vmem:[%s165 + $0x698] sm:$0xff]
        %v432 = vld [vmem:[%s165 + $0x6a0] sm:$0xff]
        %v433 = vld [vmem:[%s165 + $0x6a8] sm:$0xff]
        %v434 = vld [vmem:[%s165 + $0x6b0] sm:$0xff]
        %v435 = vld [vmem:[%s165 + $0x6b8] sm:$0xff]
        %v436 = vld [vmem:[%s165 + $0x6c0] sm:$0xff]
        %v437 = vld [vmem:[%s165 + $0x6c8] sm:$0xff]
        %v438 = vld [vmem:[%s165 + $0x6d0] sm:$0xff]
        %v439 = vld [vmem:[%s165 + $0x6d8] sm:$0xff]
        %v440 = vld [vmem:[%s165 + $0x6e0] sm:$0xff]
        %v441 = vld [vmem:[%s165 + $0x6e8] sm:$0xff]
        %v442 = vld [vmem:[%s165 + $0x6f0] sm:$0xff]
        %v443 = vld [vmem:[%s165 + $0x6f8] sm:$0xff]
        %v444 = vld [vmem:[%s165 + $0x700] sm:$0xff]
        %v445 = vld [vmem:[%s165 + $0x708] sm:$0xff]
        %v446 = vld [vmem:[%s165 + $0x710] sm:$0xff]
        %v447 = vld [vmem:[%s165 + $0x718] sm:$0xff]
        %v448 = vld [vmem:[%s165 + $0x720] sm:$0xff]
        %v449 = vld [vmem:[%s165 + $0x728] sm:$0xff]
        %v450 = vld [vmem:[%s165 + $0x730] sm:$0xff]
        %v451 = vld [vmem:[%s165 + $0x738] sm:$0xff]
        %v452 = vld [vmem:[%s165 + $0x740] sm:$0xff]
        %v453 = vld [vmem:[%s165 + $0x748] sm:$0xff]
        %v454 = vld [vmem:[%s165 + $0x750] sm:$0xff]
        %v455 = vld [vmem:[%s165 + $0x758] sm:$0xff]
        %v456 = vld [vmem:[%s165 + $0x760] sm:$0xff]
        %v457 = vld [vmem:[%s165 + $0x768] sm:$0xff]
        %v458 = vld [vmem:[%s165 + $0x770] sm:$0xff]
        %v459 = vld [vmem:[%s165 + $0x778] sm:$0xff]
        %v460 = vld [vmem:[%s165 + $0x780] sm:$0xff]
        %v461 = vld [vmem:[%s165 + $0x788] sm:$0xff]
        %v462 = vld [vmem:[%s165 + $0x790] sm:$0xff]
        %v463 = vld [vmem:[%s165 + $0x798] sm:$0xff]
        %v464 = vld [vmem:[%s165 + $0x7a0] sm:$0xff]
        %v465 = vld [vmem:[%s165 + $0x7a8] sm:$0xff]
        %v466 = vld [vmem:[%s165 + $0x7b0] sm:$0xff]
        %v467 = vld [vmem:[%s165 + $0x7b8] sm:$0xff]
        %v468 = vld [vmem:[%s165 + $0x7c0] sm:$0xff]
        %v469 = vld [vmem:[%s165 + $0x7c8] sm:$0xff]
        %v470 = vld [vmem:[%s165 + $0x7d0] sm:$0xff]
        %v471 = vld [vmem:[%s165 + $0x7d8] sm:$0xff]
        %v472 = vld [vmem:[%s165 + $0x7e0] sm:$0xff]
        %v473 = vld [vmem:[%s165 + $0x7e8] sm:$0xff]
        %v474 = vld [vmem:[%s165 + $0x7f0] sm:$0xff]
        %v475 = vld [vmem:[%s165 + $0x7f8] sm:$0xff]
        %v476 = vld [vmem:[%s165 + $0x800] sm:$0xff]
        %v477 = vld [vmem:[%s165 + $0x808] sm:$0xff]
        %v478 = vld [vmem:[%s165 + $0x810] sm:$0xff]
        %v479 = vld [vmem:[%s165 + $0x818] sm:$0xff]
        %v480 = vld [vmem:[%s165 + $0x820] sm:$0xff]
        %v481 = vld [vmem:[%s165 + $0x828] sm:$0xff]
        %v482 = vld [vmem:[%s165 + $0x830] sm:$0xff]
        %v483 = vld [vmem:[%s165 + $0x838] sm:$0xff]
        %v484 = vld [vmem:[%s165 + $0x840] sm:$0xff]
        %v485 = vld [vmem:[%s165 + $0x848] sm:$0xff]
        %v486 = vld [vmem:[%s165 + $0x850] sm:$0xff]
        %v487 = vld [vmem:[%s165 + $0x858] sm:$0xff]
        %v488 = vld [vmem:[%s165 + $0x860] sm:$0xff]
        %v489 = vld [vmem:[%s165 + $0x868] sm:$0xff]
        %v490 = vld [vmem:[%s165 + $0x870] sm:$0xff]
        %v491 = vld [vmem:[%s165 + $0x878] sm:$0xff]
        %v492 = vld [vmem:[%s165 + $0x880] sm:$0xff]
        %v493 = vld [vmem:[%s165 + $0x888] sm:$0xff]
        %v494 = vld [vmem:[%s165 + $0x890] sm:$0xff]
        %v495 = vld [vmem:[%s165 + $0x898] sm:$0xff]
        %v496 = vld [vmem:[%s165 + $0x8a0] sm:$0xff]
        %v497 = vld [vmem:[%s165 + $0x8a8] sm:$0xff]
        %v498 = vld [vmem:[%s165 + $0x8b0] sm:$0xff]
        %v499 = vld [vmem:[%s165 + $0x8b8] sm:$0xff]
        %v500 = vld [vmem:[%s165 + $0x8c0] sm:$0xff]
        %v501 = vld [vmem:[%s165 + $0x8c8] sm:$0xff]
        %v502 = vld [vmem:[%s165 + $0x8d0] sm:$0xff]
        %v503 = vld [vmem:[%s165 + $0x8d8] sm:$0xff]
        %v504 = vld [vmem:[%s165 + $0x8e0] sm:$0xff]
        %v505 = vld [vmem:[%s165 + $0x8e8] sm:$0xff]
        %v506 = vld [vmem:[%s165 + $0x8f0] sm:$0xff]
        %v507 = vld [vmem:[%s165 + $0x8f8] sm:$0xff]
        %508 = vxpose.xlu0.b32.start [1/16] %v177, 128
        %509 = vxpose.xlu0.b32.cont [2/16] %v178, 128
        %510 = vxpose.xlu0.b32.cont [3/16] %v179, 128
        %511 = vxpose.xlu0.b32.cont [4/16] %v180, 128
        %512 = vxpose.xlu0.b32.cont [5/16] %v181, 128
        %513 = vxpose.xlu0.b32.cont [6/16] %v182, 128
        %514 = vxpose.xlu0.b32.cont [7/16] %v183, 128
        %515 = vxpose.xlu0.b32.cont [8/16] %v184, 128
        %516 = vxpose.xlu0.b32.cont [9/16] %v185, 128
        %517 = vxpose.xlu0.b32.cont [10/16] %v186, 128
        %518 = vxpose.xlu0.b32.cont [11/16] %v187, 128
        %519 = vxpose.xlu0.b32.cont [12/16] %v188, 128
        %520 = vxpose.xlu0.b32.cont [13/16] %v189, 128
        %521 = vxpose.xlu0.b32.cont [14/16] %v190, 128
        %522 = vxpose.xlu0.b32.cont [15/16] %v191, 128
        %523 = vxpose.xlu0.b32.end [16/16] %v192, 128
        %v524 = vpop.trf.xlu0
        %v525 = vpop.trf.xlu0
        %v526 = vpop.trf.xlu0
        %v527 = vpop.trf.xlu0
        %v528 = vpop.trf.xlu0
        %v529 = vpop.trf.xlu0
        %v530 = vpop.trf.xlu0
        %v531 = vpop.trf.xlu0
        %v532 = vpop.trf.xlu0
        %v533 = vpop.trf.xlu0
        %v534 = vpop.trf.xlu0
        %v535 = vpop.trf.xlu0
        %v536 = vpop.trf.xlu0
        %v537 = vpop.trf.xlu0
        %v538 = vpop.trf.xlu0
        %v539 = vpop.trf.xlu0
        %540 = vxpose.xlu0.b32.start [1/16] %v193, 128
        %541 = vxpose.xlu0.b32.cont [2/16] %v194, 128
        %542 = vxpose.xlu0.b32.cont [3/16] %v195, 128
        %543 = vxpose.xlu0.b32.cont [4/16] %v196, 128
        %544 = vxpose.xlu0.b32.cont [5/16] %v197, 128
        %545 = vxpose.xlu0.b32.cont [6/16] %v198, 128
        %546 = vxpose.xlu0.b32.cont [7/16] %v199, 128
        %547 = vxpose.xlu0.b32.cont [8/16] %v200, 128
        %548 = vxpose.xlu0.b32.cont [9/16] %v201, 128
        %549 = vxpose.xlu0.b32.cont [10/16] %v202, 128
        %550 = vxpose.xlu0.b32.cont [11/16] %v203, 128
        %551 = vxpose.xlu0.b32.cont [12/16] %v204, 128
        %552 = vxpose.xlu0.b32.cont [13/16] %v205, 128
        %553 = vxpose.xlu0.b32.cont [14/16] %v206, 128
        %554 = vxpose.xlu0.b32.cont [15/16] %v207, 128
        %555 = vxpose.xlu0.b32.end [16/16] %v208, 128
        %v556 = vpop.trf.xlu0
        %v557 = vpop.trf.xlu0
        %v558 = vpop.trf.xlu0
        %v559 = vpop.trf.xlu0
        %v560 = vpop.trf.xlu0
        %v561 = vpop.trf.xlu0
        %v562 = vpop.trf.xlu0
        %v563 = vpop.trf.xlu0
        %v564 = vpop.trf.xlu0
        %v565 = vpop.trf.xlu0
        %v566 = vpop.trf.xlu0
        %v567 = vpop.trf.xlu0
        %v568 = vpop.trf.xlu0
        %v569 = vpop.trf.xlu0
        %v570 = vpop.trf.xlu0
        %v571 = vpop.trf.xlu0
        %572 = vxpose.xlu0.b32.start [1/16] %v209, 128
        %573 = vxpose.xlu0.b32.cont [2/16] %v210, 128
        %574 = vxpose.xlu0.b32.cont [3/16] %v211, 128
        %575 = vxpose.xlu0.b32.cont [4/16] %v212, 128
        %576 = vxpose.xlu0.b32.cont [5/16] %v213, 128
        %577 = vxpose.xlu0.b32.cont [6/16] %v214, 128
        %578 = vxpose.xlu0.b32.cont [7/16] %v215, 128
        %579 = vxpose.xlu0.b32.cont [8/16] %v216, 128
        %580 = vxpose.xlu0.b32.cont [9/16] %v217, 128
        %581 = vxpose.xlu0.b32.cont [10/16] %v218, 128
        %582 = vxpose.xlu0.b32.cont [11/16] %v219, 128
        %583 = vxpose.xlu0.b32.cont [12/16] 0.0, 128
        %584 = vxpose.xlu0.b32.cont [13/16] 0.0, 128
        %585 = vxpose.xlu0.b32.cont [14/16] 0.0, 128
        %586 = vxpose.xlu0.b32.cont [15/16] 0.0, 128
        %587 = vxpose.xlu0.b32.end [16/16] 0.0, 128
        %v588 = vpop.trf.xlu0
        %v589 = vpop.trf.xlu0
        %v590 = vpop.trf.xlu0
        %v591 = vpop.trf.xlu0
        %v592 = vpop.trf.xlu0
        %v593 = vpop.trf.xlu0
        %v594 = vpop.trf.xlu0
        %v595 = vpop.trf.xlu0
        %v596 = vpop.trf.xlu0
        %v597 = vpop.trf.xlu0
        %v598 = vpop.trf.xlu0
        %v599 = vpop.trf.xlu0
        %v600 = vpop.trf.xlu0
        %v601 = vpop.trf.xlu0
        %v602 = vpop.trf.xlu0
        %v603 = vpop.trf.xlu0
        %vm604 = vcmask 719872
        %v606 = vsel %vm604, %v588, 0
        %v609 = vsel %vm604, %v589, 0
        %v612 = vsel %vm604, %v590, 0
        %v615 = vsel %vm604, %v591, 0
        %v618 = vsel %vm604, %v592, 0
        %v621 = vsel %vm604, %v593, 0
        %v624 = vsel %vm604, %v594, 0
        %v627 = vsel %vm604, %v222, 0
        %v630 = vsel %vm604, %v225, 0
        %v633 = vsel %vm604, %v228, 0
        %v636 = vsel %vm604, %v231, 0
        %v639 = vsel %vm604, %v234, 0
        %v642 = vsel %vm604, %v237, 0
        %v645 = vsel %vm604, %v240, 0
        %v648 = vsel %vm604, %v243, 0
        %v651 = vsel %vm604, %v246, 0
        %v654 = vsel %vm604, %v249, 0
        %v657 = vsel %vm604, %v252, 0
        %v660 = vsel %vm604, %v255, 0
        %v663 = vsel %vm604, %v258, 0
        %v666 = vsel %vm604, %v261, 0
        %v669 = vsel %vm604, %v264, 0
        %v672 = vsel %vm604, %v267, 0
        %v675 = vsel %vm604, %v270, 0
        %v678 = vsel %vm604, %v273, 0
        %v681 = vsel %vm604, %v276, 0
        %v684 = vsel %vm604, %v279, 0
        %v687 = vsel %vm604, %v282, 0
        %v690 = vsel %vm604, %v285, 0
        %v693 = vsel %vm604, %v288, 0
        %v696 = vsel %vm604, %v291, 0
        %v699 = vsel %vm604, %v294, 0
        %v702 = vsel %vm604, %v297, 0
        %v705 = vsel %vm604, %v300, 0
        %v708 = vsel %vm604, %v303, 0
        %v711 = vsel %vm604, %v306, 0
        %v714 = vsel %vm604, %v309, 0
        %v717 = vsel %vm604, %v312, 0
        %v720 = vsel %vm604, %v315, 0
        %v723 = vsel %vm604, %v318, 0
        %v726 = vsel %vm604, %v321, 0
        %v729 = vsel %vm604, %v324, 0
        %v732 = vsel %vm604, %v327, 0
        %v735 = vsel %vm604, %v330, 0
        %v738 = vsel %vm604, %v333, 0
        %v741 = vsel %vm604, %v336, 0
        %v744 = vsel %vm604, %v339, 0
        %v747 = vsel %vm604, %v342, 0
        %v750 = vsel %vm604, %v345, 0
        %v753 = vsel %vm604, %v348, 0
        %v756 = vsel %vm604, %v351, 0
        %v759 = vsel %vm604, %v354, 0
        %v762 = vsel %vm604, %v357, 0
        %v765 = vsel %vm604, %v360, 0
        %v768 = vsel %vm604, %v363, 0
        %v771 = vsel %vm604, %v366, 0
        %v774 = vsel %vm604, %v369, 0
        %v777 = vsel %vm604, %v372, 0
        %v780 = vsel %vm604, %v375, 0
        %v783 = vsel %vm604, %v378, 0
        %v786 = vsel %vm604, %v381, 0
        %v789 = vsel %vm604, %v384, 0
        %v792 = vsel %vm604, %v387, 0
        %v795 = vsel %vm604, %v390, 0
        %v798 = vsel %vm604, %v393, 0
        %v801 = vsel %vm604, %v396, 0
        %v804 = vsel %vm604, %v399, 0
        %v807 = vsel %vm604, %v402, 0
        %v810 = vsel %vm604, %v405, 0
        %v813 = vsel %vm604, %v408, 0
        %v816 = vsel %vm604, %v411, 0
        %v819 = vsel %vm604, %v414, 0
        %v822 = vsel %vm604, %v417, 0
        %v825 = vsel %vm604, %v420, 0
        %v828 = vsel %vm604, %v423, 0
        %v831 = vsel %vm604, %v426, 0
        %v834 = vsel %vm604, %v429, 0
        %v837 = vsel %vm604, %v432, 0
        %v840 = vsel %vm604, %v435, 0
        %v843 = vsel %vm604, %v438, 0
        %v846 = vsel %vm604, %v441, 0
        %v849 = vsel %vm604, %v444, 0
        %v852 = vsel %vm604, %v447, 0
        %v855 = vsel %vm604, %v450, 0
        %v858 = vsel %vm604, %v453, 0
        %v861 = vsel %vm604, %v456, 0
        %v864 = vsel %vm604, %v459, 0
        %v867 = vsel %vm604, %v462, 0
        %v870 = vsel %vm604, %v465, 0
        %v873 = vsel %vm604, %v468, 0
        %v876 = vsel %vm604, %v471, 0
        %v879 = vsel %vm604, %v474, 0
        %v882 = vsel %vm604, %v477, 0
        %v885 = vsel %vm604, %v480, 0
        %v888 = vsel %vm604, %v483, 0
        %v891 = vsel %vm604, %v486, 0
        %v894 = vsel %vm604, %v489, 0
        %v897 = vsel %vm604, %v492, 0
        %v900 = vsel %vm604, %v495, 0
        %v903 = vsel %vm604, %v498, 0
        %v906 = vsel %vm604, %v501, 0
        %v909 = vsel %vm604, %v504, 0
        %v912 = vsel %vm604, %v507, 0
        %914 = vmatprep.subr.mxu0 %v221
        %915 = vmatpush1.xpose.msra.mxu0 %v220
        %916 = vmatprep.subr.mxu0 %v224
        %917 = vmatpush1.xpose.msra.mxu0 %v223
        %918 = vmatprep.subr.mxu0 %v227
        %919 = vmatpush1.xpose.msra.mxu0 %v226
        %920 = vmatprep.subr.mxu0 %v230
        %921 = vmatpush1.xpose.msra.mxu0 %v229
        %922 = vmatprep.subr.mxu0 %v233
        %923 = vmatpush1.xpose.msra.mxu0 %v232
        %924 = vmatprep.subr.mxu0 %v236
        %925 = vmatpush1.xpose.msra.mxu0 %v235
        %926 = vmatprep.subr.mxu0 %v239
        %927 = vmatpush1.xpose.msra.mxu0 %v238
        %928 = vmatprep.subr.mxu0 %v242
        %929 = vmatpush1.xpose.msra.mxu0 %v241
        %930 = vmatprep.subr.mxu0 %v245
        %931 = vmatpush1.xpose.msra.mxu0 %v244
        %932 = vmatprep.subr.mxu0 %v248
        %933 = vmatpush1.xpose.msra.mxu0 %v247
        %934 = vmatprep.subr.mxu0 %v251
        %935 = vmatpush1.xpose.msra.mxu0 %v250
        %936 = vmatprep.subr.mxu0 %v254
        %937 = vmatpush1.xpose.msra.mxu0 %v253
        %938 = vmatprep.subr.mxu0 %v257
        %939 = vmatpush1.xpose.msra.mxu0 %v256
        %940 = vmatprep.subr.mxu0 %v260
        %941 = vmatpush1.xpose.msra.mxu0 %v259
        %942 = vmatprep.subr.mxu0 %v263
        %943 = vmatpush1.xpose.msra.mxu0 %v262
        %944 = vmatprep.subr.mxu0 %v266
        %945 = vmatpush1.xpose.msra.mxu0 %v265
        %946 = vmatprep.subr.mxu0 %v269
        %947 = vmatpush1.xpose.msra.mxu0 %v268
        %948 = vmatprep.subr.mxu0 %v272
        %949 = vmatpush1.xpose.msra.mxu0 %v271
        %950 = vmatprep.subr.mxu0 %v275
        %951 = vmatpush1.xpose.msra.mxu0 %v274
        %952 = vmatprep.subr.mxu0 %v278
        %953 = vmatpush1.xpose.msra.mxu0 %v277
        %954 = vmatprep.subr.mxu0 %v281
        %955 = vmatpush1.xpose.msra.mxu0 %v280
        %956 = vmatprep.subr.mxu0 %v284
        %957 = vmatpush1.xpose.msra.mxu0 %v283
        %958 = vmatprep.subr.mxu0 %v287
        %959 = vmatpush1.xpose.msra.mxu0 %v286
        %960 = vmatprep.subr.mxu0 %v290
        %961 = vmatpush1.xpose.msra.mxu0 %v289
        %962 = vmatprep.subr.mxu0 %v293
        %963 = vmatpush1.xpose.msra.mxu0 %v292
        %964 = vmatprep.subr.mxu0 %v296
        %965 = vmatpush1.xpose.msra.mxu0 %v295
        %966 = vmatprep.subr.mxu0 %v299
        %967 = vmatpush1.xpose.msra.mxu0 %v298
        %968 = vmatprep.subr.mxu0 %v302
        %969 = vmatpush1.xpose.msra.mxu0 %v301
        %970 = vmatprep.subr.mxu0 %v305
        %971 = vmatpush1.xpose.msra.mxu0 %v304
        %972 = vmatprep.subr.mxu0 %v308
        %973 = vmatpush1.xpose.msra.mxu0 %v307
        %974 = vmatprep.subr.mxu0 %v311
        %975 = vmatpush1.xpose.msra.mxu0 %v310
        %976 = vmatprep.subr.mxu0 %v314
        %977 = vmatpush1.xpose.msra.mxu0 %v313
        %978 = vmatprep.mubr.f32.mxu0 %v556
        %979 = vmatmul.mubr.f32.gmra.mrb[0].mxu0 %v524
        %v980 = vpop.f32.mrb[0].mxu0
        %v981 = vadd.f32 0.0, %v980
        %v982 = vpop.f32.mrb[0].mxu0
        %v983 = vadd.f32 0.0, %v982
        %984 = vmatprep.mubr.f32.mxu0 %v557
        %985 = vmatmul.mubr.f32.gmra.mrb[0].mxu0 %v525
        %v986 = vpop.f32.mrb[0].mxu0
        %v987 = vadd.f32 0.0, %v986
        %v988 = vpop.f32.mrb[0].mxu0
        %v989 = vadd.f32 0.0, %v988
        %990 = vmatprep.mubr.f32.mxu0 %v558
        %991 = vmatmul.mubr.f32.gmra.mrb[0].mxu0 %v526
        %v992 = vpop.f32.mrb[0].mxu0
        %v993 = vadd.f32 0.0, %v992
        %v994 = vpop.f32.mrb[0].mxu0
        %v995 = vadd.f32 0.0, %v994
        %996 = vmatprep.mubr.f32.mxu0 %v559
        %997 = vmatmul.mubr.f32.gmra.mrb[0].mxu0 %v527
        %v998 = vpop.f32.mrb[0].mxu0
        %v999 = vadd.f32 0.0, %v998
        %v1000 = vpop.f32.mrb[0].mxu0
        %v1001 = vadd.f32 0.0, %v1000
        %1002 = vmatprep.mubr.f32.mxu0 %v560
        %1003 = vmatmul.mubr.f32.gmra.mrb[0].mxu0 %v528
        %v1004 = vpop.f32.mrb[0].mxu0
        %v1005 = vadd.f32 0.0, %v1004
        %v1006 = vpop.f32.mrb[0].mxu0
        %v1007 = vadd.f32 0.0, %v1006
        %1008 = vmatprep.mubr.f32.mxu0 %v561
        %1009 = vmatmul.mubr.f32.gmra.mrb[0].mxu0 %v529
        %v1010 = vpop.f32.mrb[0].mxu0
        %v1011 = vadd.f32 0.0, %v1010
        %v1012 = vpop.f32.mrb[0].mxu0
        %v1013 = vadd.f32 0.0, %v1012
        %1014 = vmatprep.mubr.f32.mxu0 %v562
        %1015 = vmatmul.mubr.f32.gmra.mrb[0].mxu0 %v530
        %v1016 = vpop.f32.mrb[0].mxu0
        %v1017 = vadd.f32 0.0, %v1016
        %v1018 = vpop.f32.mrb[0].mxu0
        %v1019 = vadd.f32 0.0, %v1018
        %1020 = vdwg.mxu0
        %1021 = vmatprep.subr.mxu0 0.0
        %1022 = vmatpush1.xpose.msra.mxu0 %v627
        %1023 = vmatprep.subr.mxu0 0.0
        %1024 = vmatpush1.xpose.msra.mxu0 %v630
        %1025 = vmatprep.subr.mxu0 0.0
        %1026 = vmatpush1.xpose.msra.mxu0 %v633
        %1027 = vmatprep.subr.mxu0 0.0
        %1028 = vmatpush1.xpose.msra.mxu0 %v636
        %1029 = vmatprep.subr.mxu0 0.0
        %1030 = vmatpush1.xpose.msra.mxu0 %v639
        %1031 = vmatprep.subr.mxu0 0.0
        %1032 = vmatpush1.xpose.msra.mxu0 %v642
        %1033 = vmatprep.subr.mxu0 0.0
        %1034 = vmatpush1.xpose.msra.mxu0 %v645
        %1035 = vmatprep.subr.mxu0 0.0
        %1036 = vmatpush1.xpose.msra.mxu0 %v648
        %1037 = vmatprep.subr.mxu0 0.0
        %1038 = vmatpush1.xpose.msra.mxu0 %v651
        %1039 = vmatprep.subr.mxu0 0.0
        %1040 = vmatpush1.xpose.msra.mxu0 %v654
        %1041 = vmatprep.subr.mxu0 0.0
        %1042 = vmatpush1.xpose.msra.mxu0 %v657
        %1043 = vmatprep.subr.mxu0 0.0
        %1044 = vmatpush1.xpose.msra.mxu0 %v660
        %1045 = vmatprep.subr.mxu0 0.0
        %1046 = vmatpush1.xpose.msra.mxu0 %v663
        %1047 = vmatprep.subr.mxu0 0.0
        %1048 = vmatpush1.xpose.msra.mxu0 %v666
        %1049 = vmatprep.subr.mxu0 0.0
        %1050 = vmatpush1.xpose.msra.mxu0 %v669
        %1051 = vmatprep.subr.mxu0 0.0
        %1052 = vmatpush1.xpose.msra.mxu0 %v672
        %1053 = vmatprep.subr.mxu0 0.0
        %1054 = vmatpush1.xpose.msra.mxu0 %v675
        %1055 = vmatprep.subr.mxu0 0.0
        %1056 = vmatpush1.xpose.msra.mxu0 %v678
        %1057 = vmatprep.subr.mxu0 0.0
        %1058 = vmatpush1.xpose.msra.mxu0 %v681
        %1059 = vmatprep.subr.mxu0 0.0
        %1060 = vmatpush1.xpose.msra.mxu0 %v684
        %1061 = vmatprep.subr.mxu0 0.0
        %1062 = vmatpush1.xpose.msra.mxu0 %v687
        %1063 = vmatprep.subr.mxu0 0.0
        %1064 = vmatpush1.xpose.msra.mxu0 %v690
        %1065 = vmatprep.subr.mxu0 0.0
        %1066 = vmatpush1.xpose.msra.mxu0 %v693
        %1067 = vmatprep.subr.mxu0 0.0
        %1068 = vmatpush1.xpose.msra.mxu0 %v696
        %1069 = vmatprep.subr.mxu0 0.0
        %1070 = vmatpush1.xpose.msra.mxu0 %v699
        %1071 = vmatprep.subr.mxu0 0.0
        %1072 = vmatpush1.xpose.msra.mxu0 %v702
        %1073 = vmatprep.subr.mxu0 0.0
        %1074 = vmatpush1.xpose.msra.mxu0 %v705
        %1075 = vmatprep.subr.mxu0 0.0
        %1076 = vmatpush1.xpose.msra.mxu0 %v708
        %1077 = vmatprep.subr.mxu0 0.0
        %1078 = vmatpush1.xpose.msra.mxu0 %v711
        %1079 = vmatprep.subr.mxu0 0.0
        %1080 = vmatpush1.xpose.msra.mxu0 %v714
        %1081 = vmatprep.subr.mxu0 0.0
        %1082 = vmatpush1.xpose.msra.mxu0 %v717
        %1083 = vmatprep.subr.mxu0 0.0
        %1084 = vmatpush1.xpose.msra.mxu0 %v720
        %1085 = vmatprep.mubr.f32.mxu0 0.0
        %1086 = vmatmul.mubr.f32.gmra.mrb[0].mxu0 %v606
        %v1087 = vpop.f32.mrb[0].mxu0
        %v1088 = vadd.f32 %v981, %v1087
        %v1089 = vpop.f32.mrb[0].mxu0
        %v1090 = vadd.f32 %v983, %v1089
        %1091 = vmatprep.mubr.f32.mxu0 0.0
        %1092 = vmatmul.mubr.f32.gmra.mrb[0].mxu0 %v609
        %v1093 = vpop.f32.mrb[0].mxu0
        %v1094 = vadd.f32 %v987, %v1093
        %v1095 = vpop.f32.mrb[0].mxu0
        %v1096 = vadd.f32 %v989, %v1095
        %1097 = vmatprep.mubr.f32.mxu0 0.0
        %1098 = vmatmul.mubr.f32.gmra.mrb[0].mxu0 %v612
        %v1099 = vpop.f32.mrb[0].mxu0
        %v1100 = vadd.f32 %v993, %v1099
        %v1101 = vpop.f32.mrb[0].mxu0
        %v1102 = vadd.f32 %v995, %v1101
        %1103 = vmatprep.mubr.f32.mxu0 0.0
        %1104 = vmatmul.mubr.f32.gmra.mrb[0].mxu0 %v615
        %v1105 = vpop.f32.mrb[0].mxu0
        %v1106 = vadd.f32 %v999, %v1105
        %v1107 = vpop.f32.mrb[0].mxu0
        %v1108 = vadd.f32 %v1001, %v1107
        %1109 = vmatprep.mubr.f32.mxu0 0.0
        %1110 = vmatmul.mubr.f32.gmra.mrb[0].mxu0 %v618
        %v1111 = vpop.f32.mrb[0].mxu0
        %v1112 = vadd.f32 %v1005, %v1111
        %v1113 = vpop.f32.mrb[0].mxu0
        %v1114 = vadd.f32 %v1007, %v1113
        %1115 = vmatprep.mubr.f32.mxu0 0.0
        %1116 = vmatmul.mubr.f32.gmra.mrb[0].mxu0 %v621
        %v1117 = vpop.f32.mrb[0].mxu0
        %v1118 = vadd.f32 %v1011, %v1117
        %v1119 = vpop.f32.mrb[0].mxu0
        %v1120 = vadd.f32 %v1013, %v1119
        %1121 = vmatprep.mubr.f32.mxu0 0.0
        %1122 = vmatmul.mubr.f32.gmra.mrb[0].mxu0 %v624
        %v1123 = vpop.f32.mrb[0].mxu0
        %v1124 = vadd.f32 %v1017, %v1123
        %v1125 = vpop.f32.mrb[0].mxu0
        %v1126 = vadd.f32 %v1019, %v1125
        %1127 = vdwg.mxu0
        %1128 = vmatprep.subr.mxu0 %v317
        %1129 = vmatpush1.xpose.msra.mxu0 %v316
        %1130 = vmatprep.subr.mxu0 %v320
        %1131 = vmatpush1.xpose.msra.mxu0 %v319
        %1132 = vmatprep.subr.mxu0 %v323
        %1133 = vmatpush1.xpose.msra.mxu0 %v322
        %1134 = vmatprep.subr.mxu0 %v326
        %1135 = vmatpush1.xpose.msra.mxu0 %v325
        %1136 = vmatprep.subr.mxu0 %v329
        %1137 = vmatpush1.xpose.msra.mxu0 %v328
        %1138 = vmatprep.subr.mxu0 %v332
        %1139 = vmatpush1.xpose.msra.mxu0 %v331
        %1140 = vmatprep.subr.mxu0 %v335
        %1141 = vmatpush1.xpose.msra.mxu0 %v334
        %1142 = vmatprep.subr.mxu0 %v338
        %1143 = vmatpush1.xpose.msra.mxu0 %v337
        %1144 = vmatprep.subr.mxu0 %v341
        %1145 = vmatpush1.xpose.msra.mxu0 %v340
        %1146 = vmatprep.subr.mxu0 %v344
        %1147 = vmatpush1.xpose.msra.mxu0 %v343
        %1148 = vmatprep.subr.mxu0 %v347
        %1149 = vmatpush1.xpose.msra.mxu0 %v346
        %1150 = vmatprep.subr.mxu0 %v350
        %1151 = vmatpush1.xpose.msra.mxu0 %v349
        %1152 = vmatprep.subr.mxu0 %v353
        %1153 = vmatpush1.xpose.msra.mxu0 %v352
        %1154 = vmatprep.subr.mxu0 %v356
        %1155 = vmatpush1.xpose.msra.mxu0 %v355
        %1156 = vmatprep.subr.mxu0 %v359
        %1157 = vmatpush1.xpose.msra.mxu0 %v358
        %1158 = vmatprep.subr.mxu0 %v362
        %1159 = vmatpush1.xpose.msra.mxu0 %v361
        %1160 = vmatprep.subr.mxu0 %v365
        %1161 = vmatpush1.xpose.msra.mxu0 %v364
        %1162 = vmatprep.subr.mxu0 %v368
        %1163 = vmatpush1.xpose.msra.mxu0 %v367
        %1164 = vmatprep.subr.mxu0 %v371
        %1165 = vmatpush1.xpose.msra.mxu0 %v370
        %1166 = vmatprep.subr.mxu0 %v374
        %1167 = vmatpush1.xpose.msra.mxu0 %v373
        %1168 = vmatprep.subr.mxu0 %v377
        %1169 = vmatpush1.xpose.msra.mxu0 %v376
        %1170 = vmatprep.subr.mxu0 %v380
        %1171 = vmatpush1.xpose.msra.mxu0 %v379
        %1172 = vmatprep.subr.mxu0 %v383
        %1173 = vmatpush1.xpose.msra.mxu0 %v382
        %1174 = vmatprep.subr.mxu0 %v386
        %1175 = vmatpush1.xpose.msra.mxu0 %v385
        %1176 = vmatprep.subr.mxu0 %v389
        %1177 = vmatpush1.xpose.msra.mxu0 %v388
        %1178 = vmatprep.subr.mxu0 %v392
        %1179 = vmatpush1.xpose.msra.mxu0 %v391
        %1180 = vmatprep.subr.mxu0 %v395
        %1181 = vmatpush1.xpose.msra.mxu0 %v394
        %1182 = vmatprep.subr.mxu0 %v398
        %1183 = vmatpush1.xpose.msra.mxu0 %v397
        %1184 = vmatprep.subr.mxu0 %v401
        %1185 = vmatpush1.xpose.msra.mxu0 %v400
        %1186 = vmatprep.subr.mxu0 %v404
        %1187 = vmatpush1.xpose.msra.mxu0 %v403
        %1188 = vmatprep.subr.mxu0 %v407
        %1189 = vmatpush1.xpose.msra.mxu0 %v406
        %1190 = vmatprep.subr.mxu0 %v410
        %1191 = vmatpush1.xpose.msra.mxu0 %v409
        %1192 = vmatprep.mubr.f32.mxu0 %v556
        %1193 = vmatmul.mubr.f32.gmra.mrb[0].mxu0 %v524
        %v1194 = vpop.f32.mrb[0].mxu0
        %v1195 = vadd.f32 0.0, %v1194
        %v1196 = vpop.f32.mrb[0].mxu0
        %v1197 = vadd.f32 0.0, %v1196
        %1198 = vmatprep.mubr.f32.mxu0 %v557
        %1199 = vmatmul.mubr.f32.gmra.mrb[0].mxu0 %v525
        %v1200 = vpop.f32.mrb[0].mxu0
        %v1201 = vadd.f32 0.0, %v1200
        %v1202 = vpop.f32.mrb[0].mxu0
        %v1203 = vadd.f32 0.0, %v1202
        %1204 = vmatprep.mubr.f32.mxu0 %v558
        %1205 = vmatmul.mubr.f32.gmra.mrb[0].mxu0 %v526
        %v1206 = vpop.f32.mrb[0].mxu0
        %v1207 = vadd.f32 0.0, %v1206
        %v1208 = vpop.f32.mrb[0].mxu0
        %v1209 = vadd.f32 0.0, %v1208
        %1210 = vmatprep.mubr.f32.mxu0 %v559
        %1211 = vmatmul.mubr.f32.gmra.mrb[0].mxu0 %v527
        %v1212 = vpop.f32.mrb[0].mxu0
        %v1213 = vadd.f32 0.0, %v1212
        %v1214 = vpop.f32.mrb[0].mxu0
        %v1215 = vadd.f32 0.0, %v1214
        %1216 = vmatprep.mubr.f32.mxu0 %v560
        %1217 = vmatmul.mubr.f32.gmra.mrb[0].mxu0 %v528
        %v1218 = vpop.f32.mrb[0].mxu0
        %v1219 = vadd.f32 0.0, %v1218
        %v1220 = vpop.f32.mrb[0].mxu0
        %v1221 = vadd.f32 0.0, %v1220
        %1222 = vmatprep.mubr.f32.mxu0 %v561
        %1223 = vmatmul.mubr.f32.gmra.mrb[0].mxu0 %v529
        %v1224 = vpop.f32.mrb[0].mxu0
        %v1225 = vadd.f32 0.0, %v1224
        %v1226 = vpop.f32.mrb[0].mxu0
        %v1227 = vadd.f32 0.0, %v1226
        %1228 = vmatprep.mubr.f32.mxu0 %v562
        %1229 = vmatmul.mubr.f32.gmra.mrb[0].mxu0 %v530
        %v1230 = vpop.f32.mrb[0].mxu0
        %v1231 = vadd.f32 0.0, %v1230
        %v1232 = vpop.f32.mrb[0].mxu0
        %v1233 = vadd.f32 0.0, %v1232
        %1234 = vdwg.mxu0
        %1235 = vmatprep.subr.mxu0 0.0
        %1236 = vmatpush1.xpose.msra.mxu0 %v723
        %1237 = vmatprep.subr.mxu0 0.0
        %1238 = vmatpush1.xpose.msra.mxu0 %v726
        %1239 = vmatprep.subr.mxu0 0.0
        %1240 = vmatpush1.xpose.msra.mxu0 %v729
        %1241 = vmatprep.subr.mxu0 0.0
        %1242 = vmatpush1.xpose.msra.mxu0 %v732
        %1243 = vmatprep.subr.mxu0 0.0
        %1244 = vmatpush1.xpose.msra.mxu0 %v735
        %1245 = vmatprep.subr.mxu0 0.0
        %1246 = vmatpush1.xpose.msra.mxu0 %v738
        %1247 = vmatprep.subr.mxu0 0.0
        %1248 = vmatpush1.xpose.msra.mxu0 %v741
        %1249 = vmatprep.subr.mxu0 0.0
        %1250 = vmatpush1.xpose.msra.mxu0 %v744
        %1251 = vmatprep.subr.mxu0 0.0
        %1252 = vmatpush1.xpose.msra.mxu0 %v747
        %1253 = vmatprep.subr.mxu0 0.0
        %1254 = vmatpush1.xpose.msra.mxu0 %v750
        %1255 = vmatprep.subr.mxu0 0.0
        %1256 = vmatpush1.xpose.msra.mxu0 %v753
        %1257 = vmatprep.subr.mxu0 0.0
        %1258 = vmatpush1.xpose.msra.mxu0 %v756
        %1259 = vmatprep.subr.mxu0 0.0
        %1260 = vmatpush1.xpose.msra.mxu0 %v759
        %1261 = vmatprep.subr.mxu0 0.0
        %1262 = vmatpush1.xpose.msra.mxu0 %v762
        %1263 = vmatprep.subr.mxu0 0.0
        %1264 = vmatpush1.xpose.msra.mxu0 %v765
        %1265 = vmatprep.subr.mxu0 0.0
        %1266 = vmatpush1.xpose.msra.mxu0 %v768
        %1267 = vmatprep.subr.mxu0 0.0
        %1268 = vmatpush1.xpose.msra.mxu0 %v771
        %1269 = vmatprep.subr.mxu0 0.0
        %1270 = vmatpush1.xpose.msra.mxu0 %v774
        %1271 = vmatprep.subr.mxu0 0.0
        %1272 = vmatpush1.xpose.msra.mxu0 %v777
        %1273 = vmatprep.subr.mxu0 0.0
        %1274 = vmatpush1.xpose.msra.mxu0 %v780
        %1275 = vmatprep.subr.mxu0 0.0
        %1276 = vmatpush1.xpose.msra.mxu0 %v783
        %1277 = vmatprep.subr.mxu0 0.0
        %1278 = vmatpush1.xpose.msra.mxu0 %v786
        %1279 = vmatprep.subr.mxu0 0.0
        %1280 = vmatpush1.xpose.msra.mxu0 %v789
        %1281 = vmatprep.subr.mxu0 0.0
        %1282 = vmatpush1.xpose.msra.mxu0 %v792
        %1283 = vmatprep.subr.mxu0 0.0
        %1284 = vmatpush1.xpose.msra.mxu0 %v795
        %1285 = vmatprep.subr.mxu0 0.0
        %1286 = vmatpush1.xpose.msra.mxu0 %v798
        %1287 = vmatprep.subr.mxu0 0.0
        %1288 = vmatpush1.xpose.msra.mxu0 %v801
        %1289 = vmatprep.subr.mxu0 0.0
        %1290 = vmatpush1.xpose.msra.mxu0 %v804
        %1291 = vmatprep.subr.mxu0 0.0
        %1292 = vmatpush1.xpose.msra.mxu0 %v807
        %1293 = vmatprep.subr.mxu0 0.0
        %1294 = vmatpush1.xpose.msra.mxu0 %v810
        %1295 = vmatprep.subr.mxu0 0.0
        %1296 = vmatpush1.xpose.msra.mxu0 %v813
        %1297 = vmatprep.subr.mxu0 0.0
        %1298 = vmatpush1.xpose.msra.mxu0 %v816
        %1299 = vmatprep.mubr.f32.mxu0 0.0
        %1300 = vmatmul.mubr.f32.gmra.mrb[0].mxu0 %v606
        %v1301 = vpop.f32.mrb[0].mxu0
        %v1302 = vadd.f32 %v1195, %v1301
        %v1303 = vpop.f32.mrb[0].mxu0
        %v1304 = vadd.f32 %v1197, %v1303
        %1305 = vmatprep.mubr.f32.mxu0 0.0
        %1306 = vmatmul.mubr.f32.gmra.mrb[0].mxu0 %v609
        %v1307 = vpop.f32.mrb[0].mxu0
        %v1308 = vadd.f32 %v1201, %v1307
        %v1309 = vpop.f32.mrb[0].mxu0
        %v1310 = vadd.f32 %v1203, %v1309
        %1311 = vmatprep.mubr.f32.mxu0 0.0
        %1312 = vmatmul.mubr.f32.gmra.mrb[0].mxu0 %v612
        %v1313 = vpop.f32.mrb[0].mxu0
        %v1314 = vadd.f32 %v1207, %v1313
        %v1315 = vpop.f32.mrb[0].mxu0
        %v1316 = vadd.f32 %v1209, %v1315
        %1317 = vmatprep.mubr.f32.mxu0 0.0
        %1318 = vmatmul.mubr.f32.gmra.mrb[0].mxu0 %v615
        %v1319 = vpop.f32.mrb[0].mxu0
        %v1320 = vadd.f32 %v1213, %v1319
        %v1321 = vpop.f32.mrb[0].mxu0
        %v1322 = vadd.f32 %v1215, %v1321
        %1323 = vmatprep.mubr.f32.mxu0 0.0
        %1324 = vmatmul.mubr.f32.gmra.mrb[0].mxu0 %v618
        %v1325 = vpop.f32.mrb[0].mxu0
        %v1326 = vadd.f32 %v1219, %v1325
        %v1327 = vpop.f32.mrb[0].mxu0
        %v1328 = vadd.f32 %v1221, %v1327
        %1329 = vmatprep.mubr.f32.mxu0 0.0
        %1330 = vmatmul.mubr.f32.gmra.mrb[0].mxu0 %v621
        %v1331 = vpop.f32.mrb[0].mxu0
        %v1332 = vadd.f32 %v1225, %v1331
        %v1333 = vpop.f32.mrb[0].mxu0
        %v1334 = vadd.f32 %v1227, %v1333
        %1335 = vmatprep.mubr.f32.mxu0 0.0
        %1336 = vmatmul.mubr.f32.gmra.mrb[0].mxu0 %v624
        %v1337 = vpop.f32.mrb[0].mxu0
        %v1338 = vadd.f32 %v1231, %v1337
        %v1339 = vpop.f32.mrb[0].mxu0
        %v1340 = vadd.f32 %v1233, %v1339
        %1341 = vdwg.mxu0
        %1342 = vmatprep.subr.mxu0 %v413
        %1343 = vmatpush1.xpose.msra.mxu0 %v412
        %1344 = vmatprep.subr.mxu0 %v416
        %1345 = vmatpush1.xpose.msra.mxu0 %v415
        %1346 = vmatprep.subr.mxu0 %v419
        %1347 = vmatpush1.xpose.msra.mxu0 %v418
        %1348 = vmatprep.subr.mxu0 %v422
        %1349 = vmatpush1.xpose.msra.mxu0 %v421
        %1350 = vmatprep.subr.mxu0 %v425
        %1351 = vmatpush1.xpose.msra.mxu0 %v424
        %1352 = vmatprep.subr.mxu0 %v428
        %1353 = vmatpush1.xpose.msra.mxu0 %v427
        %1354 = vmatprep.subr.mxu0 %v431
        %1355 = vmatpush1.xpose.msra.mxu0 %v430
        %1356 = vmatprep.subr.mxu0 %v434
        %1357 = vmatpush1.xpose.msra.mxu0 %v433
        %1358 = vmatprep.subr.mxu0 %v437
        %1359 = vmatpush1.xpose.msra.mxu0 %v436
        %1360 = vmatprep.subr.mxu0 %v440
        %1361 = vmatpush1.xpose.msra.mxu0 %v439
        %1362 = vmatprep.subr.mxu0 %v443
        %1363 = vmatpush1.xpose.msra.mxu0 %v442
        %1364 = vmatprep.subr.mxu0 %v446
        %1365 = vmatpush1.xpose.msra.mxu0 %v445
        %1366 = vmatprep.subr.mxu0 %v449
        %1367 = vmatpush1.xpose.msra.mxu0 %v448
        %1368 = vmatprep.subr.mxu0 %v452
        %1369 = vmatpush1.xpose.msra.mxu0 %v451
        %1370 = vmatprep.subr.mxu0 %v455
        %1371 = vmatpush1.xpose.msra.mxu0 %v454
        %1372 = vmatprep.subr.mxu0 %v458
        %1373 = vmatpush1.xpose.msra.mxu0 %v457
        %1374 = vmatprep.subr.mxu0 %v461
        %1375 = vmatpush1.xpose.msra.mxu0 %v460
        %1376 = vmatprep.subr.mxu0 %v464
        %1377 = vmatpush1.xpose.msra.mxu0 %v463
        %1378 = vmatprep.subr.mxu0 %v467
        %1379 = vmatpush1.xpose.msra.mxu0 %v466
        %1380 = vmatprep.subr.mxu0 %v470
        %1381 = vmatpush1.xpose.msra.mxu0 %v469
        %1382 = vmatprep.subr.mxu0 %v473
        %1383 = vmatpush1.xpose.msra.mxu0 %v472
        %1384 = vmatprep.subr.mxu0 %v476
        %1385 = vmatpush1.xpose.msra.mxu0 %v475
        %1386 = vmatprep.subr.mxu0 %v479
        %1387 = vmatpush1.xpose.msra.mxu0 %v478
        %1388 = vmatprep.subr.mxu0 %v482
        %1389 = vmatpush1.xpose.msra.mxu0 %v481
        %1390 = vmatprep.subr.mxu0 %v485
        %1391 = vmatpush1.xpose.msra.mxu0 %v484
        %1392 = vmatprep.subr.mxu0 %v488
        %1393 = vmatpush1.xpose.msra.mxu0 %v487
        %1394 = vmatprep.subr.mxu0 %v491
        %1395 = vmatpush1.xpose.msra.mxu0 %v490
        %1396 = vmatprep.subr.mxu0 %v494
        %1397 = vmatpush1.xpose.msra.mxu0 %v493
        %1398 = vmatprep.subr.mxu0 %v497
        %1399 = vmatpush1.xpose.msra.mxu0 %v496
        %1400 = vmatprep.subr.mxu0 %v500
        %1401 = vmatpush1.xpose.msra.mxu0 %v499
        %1402 = vmatprep.subr.mxu0 %v503
        %1403 = vmatpush1.xpose.msra.mxu0 %v502
        %1404 = vmatprep.subr.mxu0 %v506
        %1405 = vmatpush1.xpose.msra.mxu0 %v505
        %1406 = vmatprep.mubr.f32.mxu0 %v556
        %1407 = vmatmul.mubr.f32.gmra.mrb[0].mxu0 %v524
        %v1408 = vpop.f32.mrb[0].mxu0
        %v1409 = vadd.f32 0.0, %v1408
        %v1410 = vpop.f32.mrb[0].mxu0
        %v1411 = vadd.f32 0.0, %v1410
        %1412 = vmatprep.mubr.f32.mxu0 %v557
        %1413 = vmatmul.mubr.f32.gmra.mrb[0].mxu0 %v525
        %v1414 = vpop.f32.mrb[0].mxu0
        %v1415 = vadd.f32 0.0, %v1414
        %v1416 = vpop.f32.mrb[0].mxu0
        %v1417 = vadd.f32 0.0, %v1416
        %1418 = vmatprep.mubr.f32.mxu0 %v558
        %1419 = vmatmul.mubr.f32.gmra.mrb[0].mxu0 %v526
        %v1420 = vpop.f32.mrb[0].mxu0
        %v1421 = vadd.f32 0.0, %v1420
        %v1422 = vpop.f32.mrb[0].mxu0
        %v1423 = vadd.f32 0.0, %v1422
        %1424 = vmatprep.mubr.f32.mxu0 %v559
        %1425 = vmatmul.mubr.f32.gmra.mrb[0].mxu0 %v527
        %v1426 = vpop.f32.mrb[0].mxu0
        %v1427 = vadd.f32 0.0, %v1426
        %v1428 = vpop.f32.mrb[0].mxu0
        %v1429 = vadd.f32 0.0, %v1428
        %1430 = vmatprep.mubr.f32.mxu0 %v560
        %1431 = vmatmul.mubr.f32.gmra.mrb[0].mxu0 %v528
        %v1432 = vpop.f32.mrb[0].mxu0
        %v1433 = vadd.f32 0.0, %v1432
        %v1434 = vpop.f32.mrb[0].mxu0
        %v1435 = vadd.f32 0.0, %v1434
        %1436 = vmatprep.mubr.f32.mxu0 %v561
        %1437 = vmatmul.mubr.f32.gmra.mrb[0].mxu0 %v529
        %v1438 = vpop.f32.mrb[0].mxu0
        %v1439 = vadd.f32 0.0, %v1438
        %v1440 = vpop.f32.mrb[0].mxu0
        %v1441 = vadd.f32 0.0, %v1440
        %1442 = vmatprep.mubr.f32.mxu0 %v562
        %1443 = vmatmul.mubr.f32.gmra.mrb[0].mxu0 %v530
        %v1444 = vpop.f32.mrb[0].mxu0
        %v1445 = vadd.f32 0.0, %v1444
        %v1446 = vpop.f32.mrb[0].mxu0
        %v1447 = vadd.f32 0.0, %v1446
        %1448 = vdwg.mxu0
        %1449 = vmatprep.subr.mxu0 0.0
        %1450 = vmatpush1.xpose.msra.mxu0 %v819
        %1451 = vmatprep.subr.mxu0 0.0
        %1452 = vmatpush1.xpose.msra.mxu0 %v822
        %1453 = vmatprep.subr.mxu0 0.0
        %1454 = vmatpush1.xpose.msra.mxu0 %v825
        %1455 = vmatprep.subr.mxu0 0.0
        %1456 = vmatpush1.xpose.msra.mxu0 %v828
        %1457 = vmatprep.subr.mxu0 0.0
        %1458 = vmatpush1.xpose.msra.mxu0 %v831
        %1459 = vmatprep.subr.mxu0 0.0
        %1460 = vmatpush1.xpose.msra.mxu0 %v834
        %1461 = vmatprep.subr.mxu0 0.0
        %1462 = vmatpush1.xpose.msra.mxu0 %v837
        %1463 = vmatprep.subr.mxu0 0.0
        %1464 = vmatpush1.xpose.msra.mxu0 %v840
        %1465 = vmatprep.subr.mxu0 0.0
        %1466 = vmatpush1.xpose.msra.mxu0 %v843
        %1467 = vmatprep.subr.mxu0 0.0
        %1468 = vmatpush1.xpose.msra.mxu0 %v846
        %1469 = vmatprep.subr.mxu0 0.0
        %1470 = vmatpush1.xpose.msra.mxu0 %v849
        %1471 = vmatprep.subr.mxu0 0.0
        %1472 = vmatpush1.xpose.msra.mxu0 %v852
        %1473 = vmatprep.subr.mxu0 0.0
        %1474 = vmatpush1.xpose.msra.mxu0 %v855
        %1475 = vmatprep.subr.mxu0 0.0
        %1476 = vmatpush1.xpose.msra.mxu0 %v858
        %1477 = vmatprep.subr.mxu0 0.0
        %1478 = vmatpush1.xpose.msra.mxu0 %v861
        %1479 = vmatprep.subr.mxu0 0.0
        %1480 = vmatpush1.xpose.msra.mxu0 %v864
        %1481 = vmatprep.subr.mxu0 0.0
        %1482 = vmatpush1.xpose.msra.mxu0 %v867
        %1483 = vmatprep.subr.mxu0 0.0
        %1484 = vmatpush1.xpose.msra.mxu0 %v870
        %1485 = vmatprep.subr.mxu0 0.0
        %1486 = vmatpush1.xpose.msra.mxu0 %v873
        %1487 = vmatprep.subr.mxu0 0.0
        %1488 = vmatpush1.xpose.msra.mxu0 %v876
        %1489 = vmatprep.subr.mxu0 0.0
        %1490 = vmatpush1.xpose.msra.mxu0 %v879
        %1491 = vmatprep.subr.mxu0 0.0
        %1492 = vmatpush1.xpose.msra.mxu0 %v882
        %1493 = vmatprep.subr.mxu0 0.0
        %1494 = vmatpush1.xpose.msra.mxu0 %v885
        %1495 = vmatprep.subr.mxu0 0.0
        %1496 = vmatpush1.xpose.msra.mxu0 %v888
        %1497 = vmatprep.subr.mxu0 0.0
        %1498 = vmatpush1.xpose.msra.mxu0 %v891
        %1499 = vmatprep.subr.mxu0 0.0
        %1500 = vmatpush1.xpose.msra.mxu0 %v894
        %1501 = vmatprep.subr.mxu0 0.0
        %1502 = vmatpush1.xpose.msra.mxu0 %v897
        %1503 = vmatprep.subr.mxu0 0.0
        %1504 = vmatpush1.xpose.msra.mxu0 %v900
        %1505 = vmatprep.subr.mxu0 0.0
        %1506 = vmatpush1.xpose.msra.mxu0 %v903
        %1507 = vmatprep.subr.mxu0 0.0
        %1508 = vmatpush1.xpose.msra.mxu0 %v906
        %1509 = vmatprep.subr.mxu0 0.0
        %1510 = vmatpush1.xpose.msra.mxu0 %v909
        %1511 = vmatprep.subr.mxu0 0.0
        %1512 = vmatpush1.xpose.msra.mxu0 %v912
        %1513 = vmatprep.mubr.f32.mxu0 0.0
        %1514 = vmatmul.mubr.f32.gmra.mrb[0].mxu0 %v606
        %v1515 = vpop.f32.mrb[0].mxu0
        %v1516 = vadd.f32 %v1409, %v1515
        %v1517 = vpop.f32.mrb[0].mxu0
        %v1518 = vadd.f32 %v1411, %v1517
        %1519 = vmatprep.mubr.f32.mxu0 0.0
        %1520 = vmatmul.mubr.f32.gmra.mrb[0].mxu0 %v609
        %v1521 = vpop.f32.mrb[0].mxu0
        %v1522 = vadd.f32 %v1415, %v1521
        %v1523 = vpop.f32.mrb[0].mxu0
        %v1524 = vadd.f32 %v1417, %v1523
        %1525 = vmatprep.mubr.f32.mxu0 0.0
        %1526 = vmatmul.mubr.f32.gmra.mrb[0].mxu0 %v612
        %v1527 = vpop.f32.mrb[0].mxu0
        %v1528 = vadd.f32 %v1421, %v1527
        %v1529 = vpop.f32.mrb[0].mxu0
        %v1530 = vadd.f32 %v1423, %v1529
        %1531 = vmatprep.mubr.f32.mxu0 0.0
        %1532 = vmatmul.mubr.f32.gmra.mrb[0].mxu0 %v615
        %v1533 = vpop.f32.mrb[0].mxu0
        %v1534 = vadd.f32 %v1427, %v1533
        %v1535 = vpop.f32.mrb[0].mxu0
        %v1536 = vadd.f32 %v1429, %v1535
        %1537 = vmatprep.mubr.f32.mxu0 0.0
        %1538 = vmatmul.mubr.f32.gmra.mrb[0].mxu0 %v618
        %v1539 = vpop.f32.mrb[0].mxu0
        %v1540 = vadd.f32 %v1433, %v1539
        %v1541 = vpop.f32.mrb[0].mxu0
        %v1542 = vadd.f32 %v1435, %v1541
        %1543 = vmatprep.mubr.f32.mxu0 0.0
        %1544 = vmatmul.mubr.f32.gmra.mrb[0].mxu0 %v621
        %v1545 = vpop.f32.mrb[0].mxu0
        %v1546 = vadd.f32 %v1439, %v1545
        %v1547 = vpop.f32.mrb[0].mxu0
        %v1548 = vadd.f32 %v1441, %v1547
        %1549 = vmatprep.mubr.f32.mxu0 0.0
        %1550 = vmatmul.mubr.f32.gmra.mrb[0].mxu0 %v624
        %v1551 = vpop.f32.mrb[0].mxu0
        %v1552 = vadd.f32 %v1445, %v1551
        %v1553 = vpop.f32.mrb[0].mxu0
        %v1554 = vadd.f32 %v1447, %v1553
        %1555 = vdwg.mxu0
        %1556 = vst [vmem:[%s154] sm:$0xff] %v1088
        %1557 = vst [vmem:[%s154 + $0x8] sm:$0xff] %v1090
        %1558 = vst [vmem:[%s154 + $0x10] sm:$0xff] %v1302
        %1559 = vst [vmem:[%s154 + $0x18] sm:$0xff] %v1304
        %1560 = vst [vmem:[%s154 + $0x20] sm:$0xff] %v1516
        %1561 = vst [vmem:[%s154 + $0x28] sm:$0xff] %v1518
        %1562 = vst [vmem:[%s154 + $0x30] sm:$0xff] %v1094
        %1563 = vst [vmem:[%s154 + $0x38] sm:$0xff] %v1096
        %1564 = vst [vmem:[%s154 + $0x40] sm:$0xff] %v1308
        %1565 = vst [vmem:[%s154 + $0x48] sm:$0xff] %v1310
        %1566 = vst [vmem:[%s154 + $0x50] sm:$0xff] %v1522
        %1567 = vst [vmem:[%s154 + $0x58] sm:$0xff] %v1524
        %1568 = vst [vmem:[%s154 + $0x60] sm:$0xff] %v1100
        %1569 = vst [vmem:[%s154 + $0x68] sm:$0xff] %v1102
        %1570 = vst [vmem:[%s154 + $0x70] sm:$0xff] %v1314
        %1571 = vst [vmem:[%s154 + $0x78] sm:$0xff] %v1316
        %1572 = vst [vmem:[%s154 + $0x80] sm:$0xff] %v1528
        %1573 = vst [vmem:[%s154 + $0x88] sm:$0xff] %v1530
        %1574 = vst [vmem:[%s154 + $0x90] sm:$0xff] %v1106
        %1575 = vst [vmem:[%s154 + $0x98] sm:$0xff] %v1108
        %1576 = vst [vmem:[%s154 + $0xa0] sm:$0xff] %v1320
        %1577 = vst [vmem:[%s154 + $0xa8] sm:$0xff] %v1322
        %1578 = vst [vmem:[%s154 + $0xb0] sm:$0xff] %v1534
        %1579 = vst [vmem:[%s154 + $0xb8] sm:$0xff] %v1536
        %1580 = vst [vmem:[%s154 + $0xc0] sm:$0xff] %v1112
        %1581 = vst [vmem:[%s154 + $0xc8] sm:$0xff] %v1114
        %1582 = vst [vmem:[%s154 + $0xd0] sm:$0xff] %v1326
        %1583 = vst [vmem:[%s154 + $0xd8] sm:$0xff] %v1328
        %1584 = vst [vmem:[%s154 + $0xe0] sm:$0xff] %v1540
        %1585 = vst [vmem:[%s154 + $0xe8] sm:$0xff] %v1542
        %1586 = vst [vmem:[%s154 + $0xf0] sm:$0xff] %v1118
        %1587 = vst [vmem:[%s154 + $0xf8] sm:$0xff] %v1120
        %1588 = vst [vmem:[%s154 + $0x100] sm:$0xff] %v1332
        %1589 = vst [vmem:[%s154 + $0x108] sm:$0xff] %v1334
        %1590 = vst [vmem:[%s154 + $0x110] sm:$0xff] %v1546
        %1591 = vst [vmem:[%s154 + $0x118] sm:$0xff] %v1548
        %1592 = vst [vmem:[%s154 + $0x120] sm:$0x1] %v1124
        %1593 = vst [vmem:[%s154 + $0x128] sm:$0x1] %v1126
        %1594 = vst [vmem:[%s154 + $0x130] sm:$0x1] %v1338
        %1595 = vst [vmem:[%s154 + $0x138] sm:$0x1] %v1340
        %1596 = vst [vmem:[%s154 + $0x140] sm:$0x1] %v1552
        %1597 = vst [vmem:[%s154 + $0x148] sm:$0x1] %v1554
        %s1598 = sand.u32 %s71, 1
        %s1599 = scalar_lea.sflag [#allocation3], %s1598
        %s1600 = sand.u32 %s71, 1
        %s1601 = smul.addr %s1600, 336
        %s1602 = scalar_lea.vmem [#allocation2], %s1601
        // Predicated region
        $region29: #{tpu_custom_call.1} parent=27 // pred_check
          %p1603 = pneg %p81
        $region30: #{tpu_custom_call.1} parent=27 // pred_check_branch
          %1605 = sbr.rel (%p1603) target = $region32
        $region31: #{tpu_custom_call.1} parent=27 // pred_region
          %s1606 = smul.u32 6, %s16
          %s1607 = ssub.s32 17, %s1606
          %p1608 = scmp.lt.s32.totalorder %s1607, 6
          %s1609 = scalar_select %p1608, %s1607, 6
          %s1610 = smul.u32 896, %s1609
          %s1612 = ssub.s32 5376, %s1610
          %1613 = vsyncadd %s1599, %s1612
          %p1614 = scmp.ne.s32.totalorder 0, %s1610
          %s1615 = smul.addr %s1606, 128
          %s1616 = scalar_lea.hbm %s2, %s1615
          %s1617 = smul.u32 %s1609, 8
          %s1618 = smul.u32 %s1617, 7
          %s1619 = sshll.u32 %s1602, 4
          %s1620 = int_to_ptr.vmem [resolvable:$true] %s1619
          %s1621 = sshll.u32 %s1618, 4
          %1625 = dma.vmem_to_hbm [thread:$0]  (%p1614), %s1620, %s1621, %s1616, %s1599, 768, 2176, %s1617
        $region32: #{tpu_custom_call.1} parent=27 // pred_fallthru
          _
      $region28: #{tpu_custom_call.1} parent=5 // pred_fallthru
        _
      %p1626 = scmp.le.s32.totalorder 2, %s11
      // Predicated region
      $region33: #{tpu_custom_call.1} parent=5 // pred_check
        %p1627 = pneg %p1626
      $region34: #{tpu_custom_call.1} parent=5 // pred_check_branch
        %1629 = sbr.rel (%p1627) target = $region36
      $region35: #{tpu_custom_call.1} parent=5 // pred_region
        %s1630 = ssub.s32 %s11, 2
        // Predicated region
        $region37: #{tpu_custom_call.1} parent=35 // pred_check
          %p1631 = pneg %p87
        $region38: #{tpu_custom_call.1} parent=35 // pred_check_branch
          %1633 = sbr.rel (%p1631) target = $region40
        $region39: #{tpu_custom_call.1} parent=35 // pred_region
          %s1634 = sand.u32 %s72, 1
          %s1635 = scalar_lea.sflag [#allocation3], %s1634
          %s1636 = sand.u32 %s72, 1
          %s1637 = smul.addr %s1636, 336
          %s1638 = scalar_lea.vmem [#allocation2], %s1637
          %1639 = dma.done %s1635, 5376
        $region40: #{tpu_custom_call.1} parent=35 // pred_fallthru
          _
      $region36: #{tpu_custom_call.1} parent=5 // pred_fallthru
        _
    $region6: #{tpu_custom_call.1} parent=1 // loop_footer
      %s15 = sadd.s32 1, %s11
    $region7: #{tpu_custom_call.1} parent=1 // loop_footer_branch
      %10 = sbr.rel target = $region3
    $region8: #{tpu_custom_call.1} parent=1 // loop_exit
      _
    %1640 = vsyncpa [#allocation3], 1
    %s1641 = scalar_lea.sflag [#allocation3], 1
    %1642 = vsyncpa %s1641, 1

</llo_original>
